<compile_context>
chip_gen: v7x
topology: tpu7x:2x2x1
jax: 0.10.0
libtpu: 0.0.40
codegen_flags: <defaults>
</compile_context>

<pallas_src>
import math
import functools

import jax
import jax.numpy as jnp
from jax.experimental import pallas as pl
from jax.experimental.pallas import tpu as pltpu


def _gmsa_kernel(fr_ref, qpos_ref, ft_ref, pos_ref,
                 wq_ref, wk_ref, wv_ref, wo_ref,
                 bq_ref, bk_ref, bv_ref, bo_ref,
                 ln2_g_ref, ln2_b_ref,
                 w1_ref, b1_ref, w2_ref, b2_ref,
                 ln3_g_ref, ln3_b_ref,
                 out_ref,
                 k_scr, v_scr, *, nhead):
    f32, bf16 = jnp.float32, jnp.bfloat16
    H = nhead
    TQ, D = fr_ref.shape[1], fr_ref.shape[2]
    S = ft_ref.shape[1]
    hd = D // H
    scale = 1.0 / math.sqrt(hd)

    # ---- K/V projections: once per batch element, cached head-major in VMEM ----
    # The q grid axis is "arbitrary", so scratch persists across all nq query
    # tiles of the same batch element; q == 0 runs exactly once per b.
    @pl.when(pl.program_id(1) == 0)
    def _():
        ft = ft_ref[0]                                # (S, D) bf16
        k_in = ft + pos_ref[0]                        # with_pos_embed(ft, pos)
        K = jnp.dot(k_in, wk_ref[...], preferred_element_type=f32) + bk_ref[0]
        V = jnp.dot(ft, wv_ref[...], preferred_element_type=f32) + bv_ref[0]
        # One-time head-split relayout; per-tile attention then needs no
        # (S, D)-scale transposes.
        k_scr[...] = jnp.transpose(K.reshape(S, H, hd), (1, 0, 2)).astype(bf16)
        v_scr[...] = jnp.transpose(V.reshape(S, H, hd), (1, 0, 2)).astype(bf16)

    # ---- per-query-tile work ----
    fr = fr_ref[0].astype(f32)                        # (TQ, D), residual stays f32
    q_in = (fr + qpos_ref[0].astype(f32)).astype(bf16)   # with_pos_embed(fr, query_pos)
    Q = jnp.dot(q_in, wq_ref[...], preferred_element_type=f32) + bq_ref[0]
    # Fold the 1/sqrt(hd) softmax scale into Q (cheapest place to apply it).
    Qh = jnp.transpose((Q * scale).reshape(TQ, H, hd), (1, 0, 2)).astype(bf16)  # (H,TQ,hd)

    Kh = k_scr[...]                                   # (H, S, hd) bf16
    Vh = v_scr[...]

    # TODO(synk): for very large S on v7x (64 MiB VMEM) switch this to an
    # online-softmax loop over KV chunks so the (H, TQ, S) scores never
    # materialize at full S.
    s = jnp.einsum("hqd,hkd->hqk", Qh, Kh, preferred_element_type=f32)
    s = s - jnp.max(s, axis=-1, keepdims=True)
    p = jnp.exp(s)
    p = p * pl.reciprocal(jnp.sum(p, axis=-1, keepdims=True), approx=True)

    o = jnp.einsum("hqk,hkd->hqd", p.astype(bf16), Vh, preferred_element_type=f32)

    # Head concat + output projection.
    # TODO(synk): fuse the concat into the Wo contraction
    # (einsum('hqd,hdk->qk', o, wo.reshape(H, hd, D))) once multi-contracting-dim
    # dot_general is confirmed to lower in Mosaic; until then keep this small
    # (TQ, D) transpose (the S-scale transposes were already hoisted above).
    attn = jnp.transpose(o, (1, 0, 2)).reshape(TQ, D)
    attn = jnp.dot(attn.astype(bf16), wo_ref[...], preferred_element_type=f32) + bo_ref[0]

    # ---- residual + norm2 (dropout2 = identity in eval) ----
    x = fr + attn
    mu = jnp.mean(x, axis=-1, keepdims=True)
    var = jnp.mean((x - mu) ** 2, axis=-1, keepdims=True)
    x = (x - mu) * jax.lax.rsqrt(var + 1e-5) * ln2_g_ref[0] + ln2_b_ref[0]

    # ---- feed-forward: linear2(relu(linear1(x))); dropouts = identity ----
    h1 = jnp.dot(x.astype(bf16), w1_ref[...], preferred_element_type=f32) + b1_ref[0]
    h1 = jnp.maximum(h1, 0.0)
    ff = jnp.dot(h1.astype(bf16), w2_ref[...], preferred_element_type=f32) + b2_ref[0]

    # ---- residual + norm3 ----
    x = x + ff
    mu = jnp.mean(x, axis=-1, keepdims=True)
    var = jnp.mean((x - mu) ** 2, axis=-1, keepdims=True)
    x = (x - mu) * jax.lax.rsqrt(var + 1e-5) * ln3_g_ref[0] + ln3_b_ref[0]

    out_ref[0] = x.astype(out_ref.dtype)


def _const_spec(shape):
    """Constant-index BlockSpec; single-buffered when pipeline_mode is supported."""
    idx = lambda b, q, _n=len(shape): (0,) * _n
    try:
        return pl.BlockSpec(shape, idx, pipeline_mode=pl.Buffered(1))
    except (AttributeError, TypeError):
        return pl.BlockSpec(shape, idx)


def _chip_defaults():
    """(default query tile, vmem_limit_bytes) per TPU generation."""
    try:
        info = pltpu.get_tpu_info()
        vmem = int(getattr(info, "vmem_capacity_bytes", 0) or 0)
    except Exception:
        vmem = 0
    if vmem >= 100 * 1024 * 1024:
        # v5e / v6e: 128 MiB physical VMEM. TQ=256 matches v6e's 256-wide MXU;
        # on v5e the extra VMEM mainly buys deeper residency of K/V + weights.
        return 256, 96 * 1024 * 1024
    # v7x (64 MiB/TC) or unknown: conservative tile so (H, TQ, S) scores fit.
    return 128, 48 * 1024 * 1024


def gmsa_layer_ini(fr, ft, pos, query_pos, params, *, nhead,
                   q_tile=None, vmem_limit_bytes=None):
    B, S, D = fr.shape
    F = params["w1"].shape[1]
    assert D % nhead == 0
    hd = D // nhead

    tq_default, vmem_default = _chip_defaults()
    TQ = min(q_tile if q_tile is not None else tq_default, S)
    assert S % TQ == 0, "S must be divisible by the query tile size"
    nq = S // TQ
    vmem_limit = vmem_limit_bytes if vmem_limit_bytes is not None else vmem_default

    bf16 = jnp.bfloat16
    # Weights live in HBM as bf16 (half the DMA traffic, native MXU mode);
    # biases / LayerNorm params stay f32 (added post-accumulation).
    wq = params["wq"].astype(bf16)
    wk = params["wk"].astype(bf16)
    wv = params["wv"].astype(bf16)
    wo = params["wo"].astype(bf16)
    w1 = params["w1"].astype(bf16)
    w2 = params["w2"].astype(bf16)
    # ft / pos / query_pos are only consumed as bf16 matmul operands -> cast in HBM.
    ft_b = ft.astype(bf16)
    pos_b = pos.astype(bf16)
    qpos_b = query_pos.astype(bf16)

    qblk = pl.BlockSpec((1, TQ, D), lambda b, q: (b, q, 0))    # fr / query_pos / out
    kvblk = pl.BlockSpec((1, S, D), lambda b, q: (b, 0, 0))    # ft / pos (full seq, once per b)
    mat_dd = _const_spec((D, D))
    vec_d = _const_spec((1, D))
    mat_df = _const_spec((D, F))
    vec_f = _const_spec((1, F))
    mat_fd = _const_spec((F, D))

    kernel = functools.partial(_gmsa_kernel, nhead=nhead)

    return pl.pallas_call(
        kernel,
        out_shape=jax.ShapeDtypeStruct((B, S, D), fr.dtype),
        grid_spec=pltpu.PrefetchScalarGridSpec(
            num_scalar_prefetch=0,
            grid=(B, nq),
            in_specs=[
                qblk, qblk, kvblk, kvblk,                     # fr, query_pos, ft, pos
                mat_dd, mat_dd, mat_dd, mat_dd,               # Wq, Wk, Wv, Wo (bf16)
                vec_d, vec_d, vec_d, vec_d,                   # bq, bk, bv, bo
                vec_d, vec_d,                                 # ln2 gamma, beta
                mat_df, vec_f, mat_fd, vec_d,                 # W1, b1, W2, b2
                vec_d, vec_d,                                 # ln3 gamma, beta
            ],
            out_specs=qblk,
            scratch_shapes=[
                pltpu.VMEM((nhead, S, hd), bf16),             # cached K (head-major)
                pltpu.VMEM((nhead, S, hd), bf16),             # cached V (head-major)
            ],
        ),
        compiler_params=pltpu.CompilerParams(
            # batch axis parallel (megacore on v7x); q axis arbitrary so the
            # K/V scratch computed at q == 0 is reused by all nq query tiles.
            dimension_semantics=("parallel", "arbitrary"),
            vmem_limit_bytes=vmem_limit,
        ),
    )(fr, qpos_b, ft_b, pos_b,
      wq, wk, wv, wo,
      params["bq"], params["bk"], params["bv"], params["bo"],
      params["ln2_g"], params["ln2_b"],
      w1, params["b1"], w2, params["b2"],
      params["ln3_g"], params["ln3_b"])


def _reference(fr, ft, pos, query_pos, params, *, nhead):
    """Pure-JAX reference mirroring the kernel's bf16-matmul / f32-accumulate scheme."""
    bf16, f32 = jnp.bfloat16, jnp.float32
    B, S, D = fr.shape
    hd = D // nhead
    scale = 1.0 / math.sqrt(hd)

    def mm(x, w):
        return jnp.einsum("...ij,jk->...ik", x.astype(bf16), w.astype(bf16),
                          preferred_element_type=f32)

    q_in = fr + query_pos
    k_in = ft + pos
    Q = mm(q_in, params["wq"]) + params["bq"][0]
    K = mm(k_in, params["wk"]) + params["bk"][0]
    V = mm(ft, params["wv"]) + params["bv"][0]
    Qh = Q.reshape(B, S, nhead, hd).transpose(0, 2, 1, 3)
    Kh = K.reshape(B, S, nhead, hd).transpose(0, 2, 1, 3)
    Vh = V.reshape(B, S, nhead, hd).transpose(0, 2, 1, 3)
    s = jnp.einsum("bhqd,bhkd->bhqk", Qh.astype(bf16), Kh.astype(bf16),
                   preferred_element_type=f32) * scale
    p = jax.nn.softmax(s, axis=-1)
    o = jnp.einsum("bhqk,bhkd->bhqd", p.astype(bf16), Vh.astype(bf16),
                   preferred_element_type=f32)
    o = o.transpose(0, 2, 1, 3).reshape(B, S, D)
    attn = mm(o, params["wo"]) + params["bo"][0]

    def ln(x, g, b):
        mu = jnp.mean(x, axis=-1, keepdims=True)
        var = jnp.mean((x - mu) ** 2, axis=-1, keepdims=True)
        return (x - mu) * jax.lax.rsqrt(var + 1e-5) * g[0] + b[0]

    x = ln(fr + attn, params["ln2_g"], params["ln2_b"])
    h1 = jnp.maximum(mm(x, params["w1"]) + params["b1"][0], 0.0)
    ff = mm(h1, params["w2"]) + params["b2"][0]
    return ln(x + ff, params["ln3_g"], params["ln3_b"])


if __name__ == "__main__":
    # Small shapes consistent with the module: (B, S, d_model)
    B, S, D, NHEAD, FF = 2, 8, 32, 4, 64

    key = jax.random.PRNGKey(0)
    keys = jax.random.split(key, 16)

    def winit(k, shape, scale=0.1):
        return (scale * jax.random.normal(k, shape)).astype(jnp.float32)

    # Deterministic synthetic parameters (shapes follow the nn.Module __init__).
    params = {
        "wq": winit(keys[0], (D, D)), "bq": winit(keys[1], (1, D)),
        "wk": winit(keys[2], (D, D)), "bk": winit(keys[3], (1, D)),
        "wv": winit(keys[4], (D, D)), "bv": winit(keys[5], (1, D)),
        "wo": winit(keys[6], (D, D)), "bo": winit(keys[7], (1, D)),
        "w1": winit(keys[8], (D, FF)), "b1": winit(keys[9], (1, FF)),
        "w2": winit(keys[10], (FF, D)), "b2": winit(keys[11], (1, D)),
        "ln2_g": jnp.ones((1, D), jnp.float32), "ln2_b": jnp.zeros((1, D), jnp.float32),
        "ln3_g": jnp.ones((1, D), jnp.float32), "ln3_b": jnp.zeros((1, D), jnp.float32),
    }

    fr = jax.random.normal(keys[12], (B, S, D), jnp.float32)
    ft = jax.random.normal(keys[13], (B, S, D), jnp.float32)
    pos = jax.random.normal(keys[14], (B, S, D), jnp.float32)
    query_pos = jax.random.normal(keys[15], (B, S, D), jnp.float32)

    out = gmsa_layer_ini(fr, ft, pos, query_pos, params, nhead=NHEAD)
    out = jax.block_until_ready(out)

    ref = _reference(fr, ft, pos, query_pos, params, nhead=NHEAD)
    assert out.shape == (B, S, D)
    # bf16 matmul inputs + approx reciprocal -> looser tolerance than pure f32.
    assert jnp.allclose(out, ref, atol=3e-2, rtol=3e-2)

    print("KERNEL_OK")
</pallas_src>

<mosaic_0001>
module attributes {stable_mosaic.version = 11 : i64} {
  func.func @_gmsa_kernel(%arg0: i32, %arg1: i32, %arg2: memref<1x8x32xf32, #tpu.memory_space<vmem>>, %arg3: memref<1x8x32xbf16, #tpu.memory_space<vmem>>, %arg4: memref<1x8x32xbf16, #tpu.memory_space<vmem>>, %arg5: memref<1x8x32xbf16, #tpu.memory_space<vmem>>, %arg6: memref<32x32xbf16, #tpu.memory_space<vmem>>, %arg7: memref<32x32xbf16, #tpu.memory_space<vmem>>, %arg8: memref<32x32xbf16, #tpu.memory_space<vmem>>, %arg9: memref<32x32xbf16, #tpu.memory_space<vmem>>, %arg10: memref<1x32xf32, #tpu.memory_space<vmem>>, %arg11: memref<1x32xf32, #tpu.memory_space<vmem>>, %arg12: memref<1x32xf32, #tpu.memory_space<vmem>>, %arg13: memref<1x32xf32, #tpu.memory_space<vmem>>, %arg14: memref<1x32xf32, #tpu.memory_space<vmem>>, %arg15: memref<1x32xf32, #tpu.memory_space<vmem>>, %arg16: memref<32x64xbf16, #tpu.memory_space<vmem>>, %arg17: memref<1x64xf32, #tpu.memory_space<vmem>>, %arg18: memref<64x32xbf16, #tpu.memory_space<vmem>>, %arg19: memref<1x32xf32, #tpu.memory_space<vmem>>, %arg20: memref<1x32xf32, #tpu.memory_space<vmem>>, %arg21: memref<1x32xf32, #tpu.memory_space<vmem>>, %arg22: memref<1x8x32xf32, #tpu.memory_space<vmem>>, %arg23: memref<4x8x8xbf16, #tpu.memory_space<vmem>>, %arg24: memref<4x8x8xbf16, #tpu.memory_space<vmem>>) attributes {dimension_semantics = [#tpu.dimension_semantics<parallel>, #tpu.dimension_semantics<arbitrary>], iteration_bounds = array<i64: 2, 1>, scalar_prefetch = 0 : i64, scratch_operands = 2 : i64, tpu.core_type = #tpu.core_type<tc>, window_params = [{transform_indices = @transform_0, window_bounds = array<i64: 1, 8, 32>}, {transform_indices = @transform_1, window_bounds = array<i64: 1, 8, 32>}, {transform_indices = @transform_2, window_bounds = array<i64: 1, 8, 32>}, {transform_indices = @transform_3, window_bounds = array<i64: 1, 8, 32>}, {pipeline_mode = #tpu.pipeline_mode<synchronous>, transform_indices = @transform_4, window_bounds = array<i64: 32, 32>}, {pipeline_mode = #tpu.pipeline_mode<synchronous>, transform_indices = @transform_5, window_bounds = array<i64: 32, 32>}, {pipeline_mode = #tpu.pipeline_mode<synchronous>, transform_indices = @transform_6, window_bounds = array<i64: 32, 32>}, {pipeline_mode = #tpu.pipeline_mode<synchronous>, transform_indices = @transform_7, window_bounds = array<i64: 32, 32>}, {pipeline_mode = #tpu.pipeline_mode<synchronous>, transform_indices = @transform_8, window_bounds = array<i64: 1, 32>}, {pipeline_mode = #tpu.pipeline_mode<synchronous>, transform_indices = @transform_9, window_bounds = array<i64: 1, 32>}, {pipeline_mode = #tpu.pipeline_mode<synchronous>, transform_indices = @transform_10, window_bounds = array<i64: 1, 32>}, {pipeline_mode = #tpu.pipeline_mode<synchronous>, transform_indices = @transform_11, window_bounds = array<i64: 1, 32>}, {pipeline_mode = #tpu.pipeline_mode<synchronous>, transform_indices = @transform_12, window_bounds = array<i64: 1, 32>}, {pipeline_mode = #tpu.pipeline_mode<synchronous>, transform_indices = @transform_13, window_bounds = array<i64: 1, 32>}, {pipeline_mode = #tpu.pipeline_mode<synchronous>, transform_indices = @transform_14, window_bounds = array<i64: 32, 64>}, {pipeline_mode = #tpu.pipeline_mode<synchronous>, transform_indices = @transform_15, window_bounds = array<i64: 1, 64>}, {pipeline_mode = #tpu.pipeline_mode<synchronous>, transform_indices = @transform_16, window_bounds = array<i64: 64, 32>}, {pipeline_mode = #tpu.pipeline_mode<synchronous>, transform_indices = @transform_17, window_bounds = array<i64: 1, 32>}, {pipeline_mode = #tpu.pipeline_mode<synchronous>, transform_indices = @transform_18, window_bounds = array<i64: 1, 32>}, {pipeline_mode = #tpu.pipeline_mode<synchronous>, transform_indices = @transform_19, window_bounds = array<i64: 1, 32>}, {transform_indices = @transform_20, window_bounds = array<i64: 1, 8, 32>}]} {
    %c0_i32 = arith.constant 0 : i32
    %0 = arith.cmpi eq, %arg1, %c0_i32 : i32
    %1 = arith.extui %0 : i1 to i32
    %c0_i32_0 = arith.constant 0 : i32
    %2 = arith.cmpi ne, %1, %c0_i32_0 : i32
    scf.if %2 {
      %c0_58 = arith.constant 0 : index
      %c0_59 = arith.constant 0 : index
      %c0_60 = arith.constant 0 : index
      %126 = vector.load %arg4[%c0_58, %c0_59, %c0_60] : memref<1x8x32xbf16, #tpu.memory_space<vmem>>, vector<1x8x32xbf16>
      %127 = vector.shape_cast %126 : vector<1x8x32xbf16> to vector<8x32xbf16>
      %c0_61 = arith.constant 0 : index
      %c0_62 = arith.constant 0 : index
      %c0_63 = arith.constant 0 : index
      %128 = vector.load %arg5[%c0_61, %c0_62, %c0_63] : memref<1x8x32xbf16, #tpu.memory_space<vmem>>, vector<1x8x32xbf16>
      %129 = vector.shape_cast %128 : vector<1x8x32xbf16> to vector<8x32xbf16>
      %130 = arith.addf %127, %129 : vector<8x32xbf16>
      %c0_64 = arith.constant 0 : index
      %c0_65 = arith.constant 0 : index
      %131 = vector.load %arg7[%c0_64, %c0_65] : memref<32x32xbf16, #tpu.memory_space<vmem>>, vector<32x32xbf16>
      %cst_66 = arith.constant dense<0.000000e+00> : vector<8x32xf32>
      %132 = tpu.matmul %130, %131, %cst_66 {dimension_numbers = #tpu.dot_dimension_numbers<[1], [0], [0], [1], [0, 0, 1, 1], [], []>} : vector<8x32xbf16>, vector<32x32xbf16>, vector<8x32xf32> -> vector<8x32xf32>
      %c0_67 = arith.constant 0 : index
      %c0_68 = arith.constant 0 : index
      %133 = vector.load %arg11[%c0_67, %c0_68] : memref<1x32xf32, #tpu.memory_space<vmem>>, vector<1x32xf32>
      %134 = vector.shape_cast %133 : vector<1x32xf32> to vector<32xf32>
      %135 = vector.shape_cast %134 : vector<32xf32> to vector<1x32xf32>
      %136 = vector.broadcast %135 : vector<1x32xf32> to vector<8x32xf32>
      %137 = arith.addf %132, %136 : vector<8x32xf32>
      %c0_69 = arith.constant 0 : index
      %c0_70 = arith.constant 0 : index
      %138 = vector.load %arg8[%c0_69, %c0_70] : memref<32x32xbf16, #tpu.memory_space<vmem>>, vector<32x32xbf16>
      %cst_71 = arith.constant dense<0.000000e+00> : vector<8x32xf32>
      %139 = tpu.matmul %127, %138, %cst_71 {dimension_numbers = #tpu.dot_dimension_numbers<[1], [0], [0], [1], [0, 0, 1, 1], [], []>} : vector<8x32xbf16>, vector<32x32xbf16>, vector<8x32xf32> -> vector<8x32xf32>
      %c0_72 = arith.constant 0 : index
      %c0_73 = arith.constant 0 : index
      %140 = vector.load %arg12[%c0_72, %c0_73] : memref<1x32xf32, #tpu.memory_space<vmem>>, vector<1x32xf32>
      %141 = vector.shape_cast %140 : vector<1x32xf32> to vector<32xf32>
      %142 = vector.shape_cast %141 : vector<32xf32> to vector<1x32xf32>
      %143 = vector.broadcast %142 : vector<1x32xf32> to vector<8x32xf32>
      %144 = arith.addf %139, %143 : vector<8x32xf32>
      %145 = vector.shape_cast %137 : vector<8x32xf32> to vector<8x4x8xf32>
      %146 = tpu.transpose %145, [1, 0, 2] : vector<8x4x8xf32> -> vector<4x8x8xf32>
      %147 = arith.truncf %146 : vector<4x8x8xf32> to vector<4x8x8xbf16>
      %c0_74 = arith.constant 0 : index
      %c0_75 = arith.constant 0 : index
      %c0_76 = arith.constant 0 : index
      %148 = vector.load %arg23[%c0_74, %c0_75, %c0_76] : memref<4x8x8xbf16, #tpu.memory_space<vmem>>, vector<4x8x8xbf16>
      tpu.vector_store %arg23[%c0_74, %c0_75, %c0_76], %147 {strides = array<i32>} : memref<4x8x8xbf16, #tpu.memory_space<vmem>>, vector<4x8x8xbf16>,
      %149 = vector.shape_cast %144 : vector<8x32xf32> to vector<8x4x8xf32>
      %150 = tpu.transpose %149, [1, 0, 2] : vector<8x4x8xf32> -> vector<4x8x8xf32>
      %151 = arith.truncf %150 : vector<4x8x8xf32> to vector<4x8x8xbf16>
      %c0_77 = arith.constant 0 : index
      %c0_78 = arith.constant 0 : index
      %c0_79 = arith.constant 0 : index
      %152 = vector.load %arg24[%c0_77, %c0_78, %c0_79] : memref<4x8x8xbf16, #tpu.memory_space<vmem>>, vector<4x8x8xbf16>
      tpu.vector_store %arg24[%c0_77, %c0_78, %c0_79], %151 {strides = array<i32>} : memref<4x8x8xbf16, #tpu.memory_space<vmem>>, vector<4x8x8xbf16>,
    } else {
    }
    %c0 = arith.constant 0 : index
    %c0_1 = arith.constant 0 : index
    %c0_2 = arith.constant 0 : index
    %3 = vector.load %arg2[%c0, %c0_1, %c0_2] : memref<1x8x32xf32, #tpu.memory_space<vmem>>, vector<1x8x32xf32>
    %4 = vector.shape_cast %3 : vector<1x8x32xf32> to vector<8x32xf32>
    %c0_3 = arith.constant 0 : index
    %c0_4 = arith.constant 0 : index
    %c0_5 = arith.constant 0 : index
    %5 = vector.load %arg3[%c0_3, %c0_4, %c0_5] : memref<1x8x32xbf16, #tpu.memory_space<vmem>>, vector<1x8x32xbf16>
    %6 = vector.shape_cast %5 : vector<1x8x32xbf16> to vector<8x32xbf16>
    %7 = arith.extf %6 : vector<8x32xbf16> to vector<8x32xf32>
    %8 = arith.addf %4, %7 : vector<8x32xf32>
    %9 = arith.truncf %8 : vector<8x32xf32> to vector<8x32xbf16>
    %c0_6 = arith.constant 0 : index
    %c0_7 = arith.constant 0 : index
    %10 = vector.load %arg6[%c0_6, %c0_7] : memref<32x32xbf16, #tpu.memory_space<vmem>>, vector<32x32xbf16>
    %cst = arith.constant dense<0.000000e+00> : vector<8x32xf32>
    %11 = tpu.matmul %9, %10, %cst {dimension_numbers = #tpu.dot_dimension_numbers<[1], [0], [0], [1], [0, 0, 1, 1], [], []>} : vector<8x32xbf16>, vector<32x32xbf16>, vector<8x32xf32> -> vector<8x32xf32>
    %c0_8 = arith.constant 0 : index
    %c0_9 = arith.constant 0 : index
    %12 = vector.load %arg10[%c0_8, %c0_9] : memref<1x32xf32, #tpu.memory_space<vmem>>, vector<1x32xf32>
    %13 = vector.shape_cast %12 : vector<1x32xf32> to vector<32xf32>
    %14 = vector.shape_cast %13 : vector<32xf32> to vector<1x32xf32>
    %15 = vector.broadcast %14 : vector<1x32xf32> to vector<8x32xf32>
    %16 = arith.addf %11, %15 : vector<8x32xf32>
    %cst_10 = arith.constant 0.353553385 : f32
    %17 = vector.broadcast %cst_10 : f32 to vector<8x32xf32>
    %18 = arith.mulf %16, %17 : vector<8x32xf32>
    %19 = vector.shape_cast %18 : vector<8x32xf32> to vector<8x4x8xf32>
    %20 = tpu.transpose %19, [1, 0, 2] : vector<8x4x8xf32> -> vector<4x8x8xf32>
    %21 = arith.truncf %20 : vector<4x8x8xf32> to vector<4x8x8xbf16>
    %c0_11 = arith.constant 0 : index
    %c0_12 = arith.constant 0 : index
    %c0_13 = arith.constant 0 : index
    %22 = vector.load %arg23[%c0_11, %c0_12, %c0_13] : memref<4x8x8xbf16, #tpu.memory_space<vmem>>, vector<4x8x8xbf16>
    %c0_14 = arith.constant 0 : index
    %c0_15 = arith.constant 0 : index
    %c0_16 = arith.constant 0 : index
    %23 = vector.load %arg24[%c0_14, %c0_15, %c0_16] : memref<4x8x8xbf16, #tpu.memory_space<vmem>>, vector<4x8x8xbf16>
    "tpu.trace_start"() <{level = 10 : i32, message = "hqd,hkd->hqk"}> : () -> ()
    %cst_17 = arith.constant dense<0.000000e+00> : vector<4x8x8xf32>
    %24 = tpu.matmul %21, %22, %cst_17 {dimension_numbers = #tpu.dot_dimension_numbers<[2], [2], [1], [1], [0, 0, 0, 1, 1, 1], [0], [0]>} : vector<4x8x8xbf16>, vector<4x8x8xbf16>, vector<4x8x8xf32> -> vector<4x8x8xf32>
    "tpu.trace_stop"() : () -> ()
    %cst_18 = arith.constant dense<0xFF800000> : vector<4x8xf32>
    %25 = vector.multi_reduction <maximumf>, %24, %cst_18 [2] : vector<4x8x8xf32> to vector<4x8xf32>
    %26 = vector.shape_cast %25 : vector<4x8xf32> to vector<4x8x1xf32>
    %27 = vector.broadcast %26 : vector<4x8x1xf32> to vector<4x8x8xf32>
    %28 = arith.subf %24, %27 : vector<4x8x8xf32>
    %29 = math.exp %28 : vector<4x8x8xf32>
    %cst_19 = arith.constant dense<0.000000e+00> : vector<4x8xf32>
    %30 = vector.multi_reduction <add>, %29, %cst_19 [2] : vector<4x8x8xf32> to vector<4x8xf32>
    %31 = vector.shape_cast %30 : vector<4x8xf32> to vector<4x8x1xf32>
    %32 = tpu.reciprocal %31 {approx = true} : vector<4x8x1xf32> -> vector<4x8x1xf32>
    %33 = vector.broadcast %32 : vector<4x8x1xf32> to vector<4x8x8xf32>
    %34 = arith.mulf %29, %33 : vector<4x8x8xf32>
    %35 = arith.truncf %34 : vector<4x8x8xf32> to vector<4x8x8xbf16>
    "tpu.trace_start"() <{level = 10 : i32, message = "hqk,hkd->hqd"}> : () -> ()
    %cst_20 = arith.constant dense<0.000000e+00> : vector<4x8x8xf32>
    %36 = tpu.matmul %35, %23, %cst_20 {dimension_numbers = #tpu.dot_dimension_numbers<[2], [1], [1], [2], [0, 0, 0, 1, 1, 2], [0], [0]>} : vector<4x8x8xbf16>, vector<4x8x8xbf16>, vector<4x8x8xf32> -> vector<4x8x8xf32>
    "tpu.trace_stop"() : () -> ()
    %37 = tpu.transpose %36, [1, 0, 2] : vector<4x8x8xf32> -> vector<8x4x8xf32>
    %38 = vector.shape_cast %37 : vector<8x4x8xf32> to vector<8x32xf32>
    %39 = arith.truncf %38 : vector<8x32xf32> to vector<8x32xbf16>
    %c0_21 = arith.constant 0 : index
    %c0_22 = arith.constant 0 : index
    %40 = vector.load %arg9[%c0_21, %c0_22] : memref<32x32xbf16, #tpu.memory_space<vmem>>, vector<32x32xbf16>
    %cst_23 = arith.constant dense<0.000000e+00> : vector<8x32xf32>
    %41 = tpu.matmul %39, %40, %cst_23 {dimension_numbers = #tpu.dot_dimension_numbers<[1], [0], [0], [1], [0, 0, 1, 1], [], []>} : vector<8x32xbf16>, vector<32x32xbf16>, vector<8x32xf32> -> vector<8x32xf32>
    %c0_24 = arith.constant 0 : index
    %c0_25 = arith.constant 0 : index
    %42 = vector.load %arg13[%c0_24, %c0_25] : memref<1x32xf32, #tpu.memory_space<vmem>>, vector<1x32xf32>
    %43 = vector.shape_cast %42 : vector<1x32xf32> to vector<32xf32>
    %44 = vector.shape_cast %43 : vector<32xf32> to vector<1x32xf32>
    %45 = vector.broadcast %44 : vector<1x32xf32> to vector<8x32xf32>
    %46 = arith.addf %41, %45 : vector<8x32xf32>
    %47 = arith.addf %4, %46 : vector<8x32xf32>
    %cst_26 = arith.constant dense<0.000000e+00> : vector<8xf32>
    %48 = vector.multi_reduction <add>, %47, %cst_26 [1] : vector<8x32xf32> to vector<8xf32>
    %49 = vector.shape_cast %48 : vector<8xf32> to vector<8x1xf32>
    %cst_27 = arith.constant 3.200000e+01 : f32
    %50 = vector.broadcast %cst_27 : f32 to vector<8x1xf32>
    %51 = arith.divf %49, %50 : vector<8x1xf32>
    %52 = vector.broadcast %51 : vector<8x1xf32> to vector<8x32xf32>
    %53 = arith.subf %47, %52 : vector<8x32xf32>
    %54 = arith.mulf %53, %53 : vector<8x32xf32>
    %cst_28 = arith.constant dense<0.000000e+00> : vector<8xf32>
    %55 = vector.multi_reduction <add>, %54, %cst_28 [1] : vector<8x32xf32> to vector<8xf32>
    %56 = vector.shape_cast %55 : vector<8xf32> to vector<8x1xf32>
    %cst_29 = arith.constant 3.200000e+01 : f32
    %57 = vector.broadcast %cst_29 : f32 to vector<8x1xf32>
    %58 = arith.divf %56, %57 : vector<8x1xf32>
    %59 = vector.broadcast %51 : vector<8x1xf32> to vector<8x32xf32>
    %60 = arith.subf %47, %59 : vector<8x32xf32>
    %cst_30 = arith.constant 9.99999974E-6 : f32
    %61 = vector.broadcast %cst_30 : f32 to vector<8x1xf32>
    %62 = arith.addf %58, %61 : vector<8x1xf32>
    %63 = math.rsqrt %62 : vector<8x1xf32>
    %64 = vector.broadcast %63 : vector<8x1xf32> to vector<8x32xf32>
    %65 = arith.mulf %60, %64 : vector<8x32xf32>
    %c0_31 = arith.constant 0 : index
    %c0_32 = arith.constant 0 : index
    %66 = vector.load %arg14[%c0_31, %c0_32] : memref<1x32xf32, #tpu.memory_space<vmem>>, vector<1x32xf32>
    %67 = vector.shape_cast %66 : vector<1x32xf32> to vector<32xf32>
    %68 = vector.shape_cast %67 : vector<32xf32> to vector<1x32xf32>
    %69 = vector.broadcast %68 : vector<1x32xf32> to vector<8x32xf32>
    %70 = arith.mulf %65, %69 : vector<8x32xf32>
    %c0_33 = arith.constant 0 : index
    %c0_34 = arith.constant 0 : index
    %71 = vector.load %arg15[%c0_33, %c0_34] : memref<1x32xf32, #tpu.memory_space<vmem>>, vector<1x32xf32>
    %72 = vector.shape_cast %71 : vector<1x32xf32> to vector<32xf32>
    %73 = vector.shape_cast %72 : vector<32xf32> to vector<1x32xf32>
    %74 = vector.broadcast %73 : vector<1x32xf32> to vector<8x32xf32>
    %75 = arith.addf %70, %74 : vector<8x32xf32>
    %76 = arith.truncf %75 : vector<8x32xf32> to vector<8x32xbf16>
    %c0_35 = arith.constant 0 : index
    %c0_36 = arith.constant 0 : index
    %77 = vector.load %arg16[%c0_35, %c0_36] : memref<32x64xbf16, #tpu.memory_space<vmem>>, vector<32x64xbf16>
    %cst_37 = arith.constant dense<0.000000e+00> : vector<8x64xf32>
    %78 = tpu.matmul %76, %77, %cst_37 {dimension_numbers = #tpu.dot_dimension_numbers<[1], [0], [0], [1], [0, 0, 1, 1], [], []>} : vector<8x32xbf16>, vector<32x64xbf16>, vector<8x64xf32> -> vector<8x64xf32>
    %c0_38 = arith.constant 0 : index
    %c0_39 = arith.constant 0 : index
    %79 = vector.load %arg17[%c0_38, %c0_39] : memref<1x64xf32, #tpu.memory_space<vmem>>, vector<1x64xf32>
    %80 = vector.shape_cast %79 : vector<1x64xf32> to vector<64xf32>
    %81 = vector.shape_cast %80 : vector<64xf32> to vector<1x64xf32>
    %82 = vector.broadcast %81 : vector<1x64xf32> to vector<8x64xf32>
    %83 = arith.addf %78, %82 : vector<8x64xf32>
    %cst_40 = arith.constant 0.000000e+00 : f32
    %84 = vector.broadcast %cst_40 : f32 to vector<8x64xf32>
    %85 = arith.maximumf %83, %84 : vector<8x64xf32>
    %86 = arith.truncf %85 : vector<8x64xf32> to vector<8x64xbf16>
    %c0_41 = arith.constant 0 : index
    %c0_42 = arith.constant 0 : index
    %87 = vector.load %arg18[%c0_41, %c0_42] : memref<64x32xbf16, #tpu.memory_space<vmem>>, vector<64x32xbf16>
    %cst_43 = arith.constant dense<0.000000e+00> : vector<8x32xf32>
    %88 = tpu.matmul %86, %87, %cst_43 {dimension_numbers = #tpu.dot_dimension_numbers<[1], [0], [0], [1], [0, 0, 1, 1], [], []>} : vector<8x64xbf16>, vector<64x32xbf16>, vector<8x32xf32> -> vector<8x32xf32>
    %c0_44 = arith.constant 0 : index
    %c0_45 = arith.constant 0 : index
    %89 = vector.load %arg19[%c0_44, %c0_45] : memref<1x32xf32, #tpu.memory_space<vmem>>, vector<1x32xf32>
    %90 = vector.shape_cast %89 : vector<1x32xf32> to vector<32xf32>
    %91 = vector.shape_cast %90 : vector<32xf32> to vector<1x32xf32>
    %92 = vector.broadcast %91 : vector<1x32xf32> to vector<8x32xf32>
    %93 = arith.addf %88, %92 : vector<8x32xf32>
    %94 = arith.addf %75, %93 : vector<8x32xf32>
    %cst_46 = arith.constant dense<0.000000e+00> : vector<8xf32>
    %95 = vector.multi_reduction <add>, %94, %cst_46 [1] : vector<8x32xf32> to vector<8xf32>
    %96 = vector.shape_cast %95 : vector<8xf32> to vector<8x1xf32>
    %cst_47 = arith.constant 3.200000e+01 : f32
    %97 = vector.broadcast %cst_47 : f32 to vector<8x1xf32>
    %98 = arith.divf %96, %97 : vector<8x1xf32>
    %99 = vector.broadcast %98 : vector<8x1xf32> to vector<8x32xf32>
    %100 = arith.subf %94, %99 : vector<8x32xf32>
    %101 = arith.mulf %100, %100 : vector<8x32xf32>
    %cst_48 = arith.constant dense<0.000000e+00> : vector<8xf32>
    %102 = vector.multi_reduction <add>, %101, %cst_48 [1] : vector<8x32xf32> to vector<8xf32>
    %103 = vector.shape_cast %102 : vector<8xf32> to vector<8x1xf32>
    %cst_49 = arith.constant 3.200000e+01 : f32
    %104 = vector.broadcast %cst_49 : f32 to vector<8x1xf32>
    %105 = arith.divf %103, %104 : vector<8x1xf32>
    %106 = vector.broadcast %98 : vector<8x1xf32> to vector<8x32xf32>
    %107 = arith.subf %94, %106 : vector<8x32xf32>
    %cst_50 = arith.constant 9.99999974E-6 : f32
    %108 = vector.broadcast %cst_50 : f32 to vector<8x1xf32>
    %109 = arith.addf %105, %108 : vector<8x1xf32>
    %110 = math.rsqrt %109 : vector<8x1xf32>
    %111 = vector.broadcast %110 : vector<8x1xf32> to vector<8x32xf32>
    %112 = arith.mulf %107, %111 : vector<8x32xf32>
    %c0_51 = arith.constant 0 : index
    %c0_52 = arith.constant 0 : index
    %113 = vector.load %arg20[%c0_51, %c0_52] : memref<1x32xf32, #tpu.memory_space<vmem>>, vector<1x32xf32>
    %114 = vector.shape_cast %113 : vector<1x32xf32> to vector<32xf32>
    %115 = vector.shape_cast %114 : vector<32xf32> to vector<1x32xf32>
    %116 = vector.broadcast %115 : vector<1x32xf32> to vector<8x32xf32>
    %117 = arith.mulf %112, %116 : vector<8x32xf32>
    %c0_53 = arith.constant 0 : index
    %c0_54 = arith.constant 0 : index
    %118 = vector.load %arg21[%c0_53, %c0_54] : memref<1x32xf32, #tpu.memory_space<vmem>>, vector<1x32xf32>
    %119 = vector.shape_cast %118 : vector<1x32xf32> to vector<32xf32>
    %120 = vector.shape_cast %119 : vector<32xf32> to vector<1x32xf32>
    %121 = vector.broadcast %120 : vector<1x32xf32> to vector<8x32xf32>
    %122 = arith.addf %117, %121 : vector<8x32xf32>
    %c0_55 = arith.constant 0 : index
    %c0_56 = arith.constant 0 : index
    %c0_57 = arith.constant 0 : index
    %123 = vector.load %arg22[%c0_55, %c0_56, %c0_57] : memref<1x8x32xf32, #tpu.memory_space<vmem>>, vector<1x8x32xf32>
    %124 = vector.shape_cast %123 : vector<1x8x32xf32> to vector<8x32xf32>
    %125 = vector.shape_cast %122 : vector<8x32xf32> to vector<1x8x32xf32>
    tpu.vector_store %arg22[%c0_55, %c0_56, %c0_57], %125 {strides = array<i32>} : memref<1x8x32xf32, #tpu.memory_space<vmem>>, vector<1x8x32xf32>,
    return
  }
  func.func @transform_0(%arg0: i32, %arg1: i32) -> (i32, i32, i32) {
    %c0_i32 = arith.constant 0 : i32
    %c0_i32_0 = arith.constant 0 : i32
    return %arg0, %arg1, %c0_i32 : i32, i32, i32
  }
  func.func @transform_1(%arg0: i32, %arg1: i32) -> (i32, i32, i32) {
    %c0_i32 = arith.constant 0 : i32
    %c0_i32_0 = arith.constant 0 : i32
    return %arg0, %arg1, %c0_i32 : i32, i32, i32
  }
  func.func @transform_2(%arg0: i32, %arg1: i32) -> (i32, i32, i32) {
    %c0_i32 = arith.constant 0 : i32
    %c0_i32_0 = arith.constant 0 : i32
    %c0_i32_1 = arith.constant 0 : i32
    return %arg0, %c0_i32, %c0_i32_0 : i32, i32, i32
  }
  func.func @transform_3(%arg0: i32, %arg1: i32) -> (i32, i32, i32) {
    %c0_i32 = arith.constant 0 : i32
    %c0_i32_0 = arith.constant 0 : i32
    %c0_i32_1 = arith.constant 0 : i32
    return %arg0, %c0_i32, %c0_i32_0 : i32, i32, i32
  }
  func.func @transform_4(%arg0: i32, %arg1: i32) -> (i32, i32) {
    %c0_i32 = arith.constant 0 : i32
    %c0_i32_0 = arith.constant 0 : i32
    %c0_i32_1 = arith.constant 0 : i32
    return %c0_i32, %c0_i32_0 : i32, i32
  }
  func.func @transform_5(%arg0: i32, %arg1: i32) -> (i32, i32) {
    %c0_i32 = arith.constant 0 : i32
    %c0_i32_0 = arith.constant 0 : i32
    %c0_i32_1 = arith.constant 0 : i32
    return %c0_i32, %c0_i32_0 : i32, i32
  }
  func.func @transform_6(%arg0: i32, %arg1: i32) -> (i32, i32) {
    %c0_i32 = arith.constant 0 : i32
    %c0_i32_0 = arith.constant 0 : i32
    %c0_i32_1 = arith.constant 0 : i32
    return %c0_i32, %c0_i32_0 : i32, i32
  }
  func.func @transform_7(%arg0: i32, %arg1: i32) -> (i32, i32) {
    %c0_i32 = arith.constant 0 : i32
    %c0_i32_0 = arith.constant 0 : i32
    %c0_i32_1 = arith.constant 0 : i32
    return %c0_i32, %c0_i32_0 : i32, i32
  }
  func.func @transform_8(%arg0: i32, %arg1: i32) -> (i32, i32) {
    %c0_i32 = arith.constant 0 : i32
    %c0_i32_0 = arith.constant 0 : i32
    %c0_i32_1 = arith.constant 0 : i32
    return %c0_i32, %c0_i32_0 : i32, i32
  }
  func.func @transform_9(%arg0: i32, %arg1: i32) -> (i32, i32) {
    %c0_i32 = arith.constant 0 : i32
    %c0_i32_0 = arith.constant 0 : i32
    %c0_i32_1 = arith.constant 0 : i32
    return %c0_i32, %c0_i32_0 : i32, i32
  }
  func.func @transform_10(%arg0: i32, %arg1: i32) -> (i32, i32) {
    %c0_i32 = arith.constant 0 : i32
    %c0_i32_0 = arith.constant 0 : i32
    %c0_i32_1 = arith.constant 0 : i32
    return %c0_i32, %c0_i32_0 : i32, i32
  }
  func.func @transform_11(%arg0: i32, %arg1: i32) -> (i32, i32) {
    %c0_i32 = arith.constant 0 : i32
    %c0_i32_0 = arith.constant 0 : i32
    %c0_i32_1 = arith.constant 0 : i32
    return %c0_i32, %c0_i32_0 : i32, i32
  }
  func.func @transform_12(%arg0: i32, %arg1: i32) -> (i32, i32) {
    %c0_i32 = arith.constant 0 : i32
    %c0_i32_0 = arith.constant 0 : i32
    %c0_i32_1 = arith.constant 0 : i32
    return %c0_i32, %c0_i32_0 : i32, i32
  }
  func.func @transform_13(%arg0: i32, %arg1: i32) -> (i32, i32) {
    %c0_i32 = arith.constant 0 : i32
    %c0_i32_0 = arith.constant 0 : i32
    %c0_i32_1 = arith.constant 0 : i32
    return %c0_i32, %c0_i32_0 : i32, i32
  }
  func.func @transform_14(%arg0: i32, %arg1: i32) -> (i32, i32) {
    %c0_i32 = arith.constant 0 : i32
    %c0_i32_0 = arith.constant 0 : i32
    %c0_i32_1 = arith.constant 0 : i32
    return %c0_i32, %c0_i32_0 : i32, i32
  }
  func.func @transform_15(%arg0: i32, %arg1: i32) -> (i32, i32) {
    %c0_i32 = arith.constant 0 : i32
    %c0_i32_0 = arith.constant 0 : i32
    %c0_i32_1 = arith.constant 0 : i32
    return %c0_i32, %c0_i32_0 : i32, i32
  }
  func.func @transform_16(%arg0: i32, %arg1: i32) -> (i32, i32) {
    %c0_i32 = arith.constant 0 : i32
    %c0_i32_0 = arith.constant 0 : i32
    %c0_i32_1 = arith.constant 0 : i32
    return %c0_i32, %c0_i32_0 : i32, i32
  }
  func.func @transform_17(%arg0: i32, %arg1: i32) -> (i32, i32) {
    %c0_i32 = arith.constant 0 : i32
    %c0_i32_0 = arith.constant 0 : i32
    %c0_i32_1 = arith.constant 0 : i32
    return %c0_i32, %c0_i32_0 : i32, i32
  }
  func.func @transform_18(%arg0: i32, %arg1: i32) -> (i32, i32) {
    %c0_i32 = arith.constant 0 : i32
    %c0_i32_0 = arith.constant 0 : i32
    %c0_i32_1 = arith.constant 0 : i32
    return %c0_i32, %c0_i32_0 : i32, i32
  }
  func.func @transform_19(%arg0: i32, %arg1: i32) -> (i32, i32) {
    %c0_i32 = arith.constant 0 : i32
    %c0_i32_0 = arith.constant 0 : i32
    %c0_i32_1 = arith.constant 0 : i32
    return %c0_i32, %c0_i32_0 : i32, i32
  }
  func.func @transform_20(%arg0: i32, %arg1: i32) -> (i32, i32, i32) {
    %c0_i32 = arith.constant 0 : i32
    %c0_i32_0 = arith.constant 0 : i32
    return %arg0, %arg1, %c0_i32 : i32, i32, i32
  }
}

</mosaic_0001>

<llo_original>
// kernel: tpu_custom_call.1
$region0: #{tpu_custom_call.1}
  #allocation0 [shape = 'u32[]', space=smem, size = 0x4, offset = 0x4, fixed_abs, tag = 'smem constant byte address 0x4 - core index']
  #allocation1 [shape = 'u32[144,128]{1,0:T(1,128)}', space=vmem, size = 0x12000, scoped, tag = 'internal scratch']
  #allocation2 [shape = 'bf16[4,8,8]{2,1,0:T(8,128)(2,1)}', space=vmem, size = 0x2000, scoped, tag = 'scratch operand']
  #allocation3 [shape = 'bf16[4,8,8]{2,1,0:T(8,128)(2,1)}', space=vmem, size = 0x2000, scoped, tag = 'scratch operand']
  %s0 = inlined_call_operand.vmem [shape: f32[2,8,32], index: 0, kind: input, shape index: {}]
  %s1 = inlined_call_operand.hbm [shape: bf16[2,8,32], index: 1, kind: input, shape index: {}]
  %s2 = inlined_call_operand.hbm [shape: bf16[2,8,32], index: 2, kind: input, shape index: {}]
  %s3 = inlined_call_operand.hbm [shape: bf16[2,8,32], index: 3, kind: input, shape index: {}]
  %s4 = inlined_call_operand.vmem [shape: bf16[32,32], index: 4, kind: input, shape index: {}]
  %s5 = inlined_call_operand.vmem [shape: bf16[32,32], index: 5, kind: input, shape index: {}]
  %s6 = inlined_call_operand.hbm [shape: bf16[32,32], index: 6, kind: input, shape index: {}]
  %s7 = inlined_call_operand.hbm [shape: bf16[32,32], index: 7, kind: input, shape index: {}]
  %s8 = inlined_call_operand.vmem [shape: f32[1,32], index: 8, kind: input, shape index: {}]
  %s9 = inlined_call_operand.vmem [shape: f32[1,32], index: 9, kind: input, shape index: {}]
  %s10 = inlined_call_operand.vmem [shape: f32[1,32], index: 10, kind: input, shape index: {}]
  %s11 = inlined_call_operand.vmem [shape: f32[1,32], index: 11, kind: input, shape index: {}]
  %s12 = inlined_call_operand.vmem [shape: f32[1,32], index: 12, kind: input, shape index: {}]
  %s13 = inlined_call_operand.vmem [shape: f32[1,32], index: 13, kind: input, shape index: {}]
  %s14 = inlined_call_operand.vmem [shape: bf16[32,64], index: 14, kind: input, shape index: {}]
  %s15 = inlined_call_operand.vmem [shape: f32[1,64], index: 15, kind: input, shape index: {}]
  %s16 = inlined_call_operand.vmem [shape: bf16[64,32], index: 16, kind: input, shape index: {}]
  %s17 = inlined_call_operand.vmem [shape: f32[1,32], index: 17, kind: input, shape index: {}]
  %s18 = inlined_call_operand.vmem [shape: f32[1,32], index: 18, kind: input, shape index: {}]
  %s19 = inlined_call_operand.vmem [shape: f32[1,32], index: 19, kind: input, shape index: {}]
  %s20 = inlined_call_operand.hbm [shape: f32[2,8,32], index: 20, kind: output, shape index: {}]
  %s21 = sld [smem:[#allocation0]]
  $region137: #{tpu_custom_call.1} parent=0
    _
  %s23 = ssub.s32 1, %s21
  %s24 = scalar_select 0, %s23, %s21
  $region1: #{tpu_custom_call.1} parent=0
    #allocation4 [shape = 'u8[4096]{0}', space=vmem, size = 0x1000, scoped, tag = 'input window, operand 1']
    #allocation5 [shape = 's32[2]{0}', space=sflag, size = 0x8, scoped, tag = 'scoped memory for tpu_custom_call.1']
    #allocation6 [shape = 's32[2]{0}', space=sflag, size = 0x8, scoped, tag = 'scoped memory for tpu_custom_call.1']
    #allocation7 [shape = 'u8[4096]{0}', space=vmem, size = 0x1000, scoped, tag = 'input window, operand 2']
    #allocation8 [shape = 's32[2]{0}', space=sflag, size = 0x8, scoped, tag = 'scoped memory for tpu_custom_call.1']
    #allocation9 [shape = 'u8[4096]{0}', space=vmem, size = 0x1000, scoped, tag = 'input window, operand 3']
    #allocation10 [shape = 'u8[8192]{0}', space=vmem, size = 0x2000, scoped, tag = 'input window, operand 6, single buffered']
    #allocation11 [shape = 's32[1]{0}', space=sflag, size = 0x4, scoped, tag = 'scoped memory for tpu_custom_call.1']
    #allocation12 [shape = 'u8[8192]{0}', space=vmem, size = 0x2000, scoped, tag = 'input window, operand 7, single buffered']
    #allocation13 [shape = 'u8[8192]{0}', space=vmem, size = 0x2000, scoped, tag = 'output window, operand 0']
    %25 = vsyncpa [#allocation5], 0
    %s26 = scalar_lea.sflag [#allocation5], 1
    %27 = vsyncpa %s26, 0
    %28 = vsyncpa [#allocation8], 0
    %s29 = scalar_lea.sflag [#allocation8], 1
    %30 = vsyncpa %s29, 0
    %31 = vsyncpa [#allocation11], 0
    %32 = vsyncpa [#allocation6], 0
    %s33 = scalar_lea.sflag [#allocation6], 1
    %34 = vsyncpa %s33, 0
    loop: start=0, step=1, limit=4
    $region2: #{tpu_custom_call.1} parent=1 // loop_pre_header
      _
    $region3: #{tpu_custom_call.1} parent=1 // loop_header
      %s36 = sphi 0, %s40
      %p37 = scmp.ge.s32.totalorder %s36, 4
      %s43 = sphi 0, %s55
      %s44 = sphi 0, %s51
      %s45 = sphi 0, %s43
      %s46 = sphi 0, %s44
      %s47 = sphi 0, %s45
      %s48 = sphi 0, %s46
      %s60 = sphi 0, %s62
      %s63 = sphi 0, %s60
      %s64 = sphi 0, %s63
      %s80 = sphi 0, %s64
      %s88 = sphi 0, %s90
      %s91 = sphi 0, %s88
      %s92 = sphi 0, %s91
      %s108 = sphi 0, %s92
      %s114 = sphi 0, %s116
      %s117 = sphi 0, %s114
      %s118 = sphi 0, %s117
      %s134 = sphi 0, %s118
      %s140 = sphi 0, %s142
      %s143 = sphi 0, %s140
      %s144 = sphi 0, %s143
      %s160 = sphi 0, %s144
      %s164 = sphi 0, %s164
      %s166 = sphi 0, %s164
      %s167 = sphi 0, %s166
      %s181 = sphi 0, %s167
      %s185 = sphi 0, %s185
      %s187 = sphi 0, %s185
      %s188 = sphi 0, %s187
      %s202 = sphi 0, %s188
      %s206 = sphi 0, %s206
      %s208 = sphi 0, %s206
      %s209 = sphi 0, %s208
      %s223 = sphi 0, %s209
      %s227 = sphi 0, %s227
      %s229 = sphi 0, %s227
      %s230 = sphi 0, %s229
      %s244 = sphi 0, %s230
      %s248 = sphi 0, %s248
      %s250 = sphi 0, %s248
      %s251 = sphi 0, %s250
      %s265 = sphi 0, %s251
      %s269 = sphi 0, %s269
      %s271 = sphi 0, %s269
      %s272 = sphi 0, %s271
      %s286 = sphi 0, %s272
      %s290 = sphi 0, %s290
      %s292 = sphi 0, %s290
      %s293 = sphi 0, %s292
      %s307 = sphi 0, %s293
      %s311 = sphi 0, %s311
      %s313 = sphi 0, %s311
      %s314 = sphi 0, %s313
      %s328 = sphi 0, %s314
      %s332 = sphi 0, %s332
      %s334 = sphi 0, %s332
      %s335 = sphi 0, %s334
      %s349 = sphi 0, %s335
      %s353 = sphi 0, %s353
      %s355 = sphi 0, %s353
      %s356 = sphi 0, %s355
      %s370 = sphi 0, %s356
      %s374 = sphi 0, %s374
      %s376 = sphi 0, %s374
      %s377 = sphi 0, %s376
      %s391 = sphi 0, %s377
      %s395 = sphi 0, %s395
      %s397 = sphi 0, %s395
      %s398 = sphi 0, %s397
      %s412 = sphi 0, %s398
      %s416 = sphi 0, %s416
      %s418 = sphi 0, %s416
      %s419 = sphi 0, %s418
      %s433 = sphi 0, %s419
      %s437 = sphi 0, %s437
      %s439 = sphi 0, %s437
      %s440 = sphi 0, %s439
      %s454 = sphi 0, %s440
      %s458 = sphi 0, %s458
      %s460 = sphi 0, %s458
      %s461 = sphi 0, %s460
      %s475 = sphi 0, %s461
      %s479 = sphi 0, %s479
      %s481 = sphi 0, %s479
      %s482 = sphi 0, %s481
      %s496 = sphi 0, %s482
      %s504 = sphi 0, %s506
      %s507 = sphi 0, %s504
      %s508 = sphi 0, %s507
      %s524 = sphi 0, %s508
    $region4: #{tpu_custom_call.1} parent=1 // loop_header_branch
      %39 = sbr.rel (%p37) target = $region8
    $region5: #{tpu_custom_call.1} parent=1 // loop_body
      %s41 = ssub.s32 %s36, 1
      %s42 = ssub.s32 %s36, 2
      %s49 = sadd.s32 1, %s44
      %p50 = scmp.ge.s32.totalorder %s49, 1
      %s51 = scalar_select %p50, 0, %s49
      %s52 = sadd.s32 1, %s43
      %s53 = scalar_select %p50, %s52, %s43
      %p54 = scmp.ge.s32.totalorder %s53, 2
      %s55 = scalar_select %p54, 0, %s53
      %s56 = ssub.s32 %s43, %s55
      %s57 = ssub.s32 %s44, %s51
      %s58 = sor.u32 %s56, %s57
      %p59 = scmp.eq.s32.totalorder %s58, 0
      %s61 = sadd.s32 %s60, 1
      %s62 = scalar_select %p59, %s60, %s61
      %p65 = pneg %p59
      %p66 = scmp.eq.s32.totalorder %s36, 1
      %p67 = por %p65, %p66
      %p68 = scmp.ne.s32.totalorder %s60, %s63
      %p69 = scmp.eq.s32.totalorder %s36, 0
      %p70 = por %p68, %p69
      %p71 = scmp.ne.s32.totalorder %s60, %s63
      %p72 = scmp.eq.s32.totalorder %s41, 1
      %p73 = por %p71, %p72
      %p74 = scmp.ne.s32.totalorder %s63, %s64
      %p75 = scmp.eq.s32.totalorder %s41, 0
      %p76 = por %p74, %p75
      %p77 = scmp.ne.s32.totalorder %s63, %s64
      %p78 = scmp.eq.s32.totalorder %s42, 1
      %p79 = por %p77, %p78
      %p81 = scmp.ne.s32.totalorder %s64, %s80
      %p82 = scmp.eq.s32.totalorder %s42, 0
      %p83 = por %p81, %p82
      %s84 = ssub.s32 %s43, %s55
      %s85 = ssub.s32 %s44, %s51
      %s86 = sor.u32 %s84, %s85
      %p87 = scmp.eq.s32.totalorder %s86, 0
      %s89 = sadd.s32 %s88, 1
      %s90 = scalar_select %p87, %s88, %s89
      %p93 = pneg %p87
      %p94 = scmp.eq.s32.totalorder %s36, 1
      %p95 = por %p93, %p94
      %p96 = scmp.ne.s32.totalorder %s88, %s91
      %p97 = scmp.eq.s32.totalorder %s36, 0
      %p98 = por %p96, %p97
      %p99 = scmp.ne.s32.totalorder %s88, %s91
      %p100 = scmp.eq.s32.totalorder %s41, 1
      %p101 = por %p99, %p100
      %p102 = scmp.ne.s32.totalorder %s91, %s92
      %p103 = scmp.eq.s32.totalorder %s41, 0
      %p104 = por %p102, %p103
      %p105 = scmp.ne.s32.totalorder %s91, %s92
      %p106 = scmp.eq.s32.totalorder %s42, 1
      %p107 = por %p105, %p106
      %p109 = scmp.ne.s32.totalorder %s92, %s108
      %p110 = scmp.eq.s32.totalorder %s42, 0
      %p111 = por %p109, %p110
      %s112 = ssub.s32 %s43, %s55
      %p113 = scmp.eq.s32.totalorder %s112, 0
      %s115 = sadd.s32 %s114, 1
      %s116 = scalar_select %p113, %s114, %s115
      %p119 = pneg %p113
      %p120 = scmp.eq.s32.totalorder %s36, 1
      %p121 = por %p119, %p120
      %p122 = scmp.ne.s32.totalorder %s114, %s117
      %p123 = scmp.eq.s32.totalorder %s36, 0
      %p124 = por %p122, %p123
      %p125 = scmp.ne.s32.totalorder %s114, %s117
      %p126 = scmp.eq.s32.totalorder %s41, 1
      %p127 = por %p125, %p126
      %p128 = scmp.ne.s32.totalorder %s117, %s118
      %p129 = scmp.eq.s32.totalorder %s41, 0
      %p130 = por %p128, %p129
      %p131 = scmp.ne.s32.totalorder %s117, %s118
      %p132 = scmp.eq.s32.totalorder %s42, 1
      %p133 = por %p131, %p132
      %p135 = scmp.ne.s32.totalorder %s118, %s134
      %p136 = scmp.eq.s32.totalorder %s42, 0
      %p137 = por %p135, %p136
      %s138 = ssub.s32 %s43, %s55
      %p139 = scmp.eq.s32.totalorder %s138, 0
      %s141 = sadd.s32 %s140, 1
      %s142 = scalar_select %p139, %s140, %s141
      %p145 = pneg %p139
      %p146 = scmp.eq.s32.totalorder %s36, 1
      %p147 = por %p145, %p146
      %p148 = scmp.ne.s32.totalorder %s140, %s143
      %p149 = scmp.eq.s32.totalorder %s36, 0
      %p150 = por %p148, %p149
      %p151 = scmp.ne.s32.totalorder %s140, %s143
      %p152 = scmp.eq.s32.totalorder %s41, 1
      %p153 = por %p151, %p152
      %p154 = scmp.ne.s32.totalorder %s143, %s144
      %p155 = scmp.eq.s32.totalorder %s41, 0
      %p156 = por %p154, %p155
      %p157 = scmp.ne.s32.totalorder %s143, %s144
      %p158 = scmp.eq.s32.totalorder %s42, 1
      %p159 = por %p157, %p158
      %p161 = scmp.ne.s32.totalorder %s144, %s160
      %p162 = scmp.eq.s32.totalorder %s42, 0
      %p163 = por %p161, %p162
      %s165 = sadd.s32 %s164, 1
      %p168 = scmp.eq.s32.totalorder %s36, 1
      %p169 = scmp.ne.s32.totalorder %s164, %s166
      %p170 = scmp.eq.s32.totalorder %s36, 0
      %p171 = por %p169, %p170
      %p172 = scmp.ne.s32.totalorder %s164, %s166
      %p173 = scmp.eq.s32.totalorder %s41, 1
      %p174 = por %p172, %p173
      %p175 = scmp.ne.s32.totalorder %s166, %s167
      %p176 = scmp.eq.s32.totalorder %s41, 0
      %p177 = por %p175, %p176
      %p178 = scmp.ne.s32.totalorder %s166, %s167
      %p179 = scmp.eq.s32.totalorder %s42, 1
      %p180 = por %p178, %p179
      %p182 = scmp.ne.s32.totalorder %s167, %s181
      %p183 = scmp.eq.s32.totalorder %s42, 0
      %p184 = por %p182, %p183
      %s186 = sadd.s32 %s185, 1
      %p189 = scmp.eq.s32.totalorder %s36, 1
      %p190 = scmp.ne.s32.totalorder %s185, %s187
      %p191 = scmp.eq.s32.totalorder %s36, 0
      %p192 = por %p190, %p191
      %p193 = scmp.ne.s32.totalorder %s185, %s187
      %p194 = scmp.eq.s32.totalorder %s41, 1
      %p195 = por %p193, %p194
      %p196 = scmp.ne.s32.totalorder %s187, %s188
      %p197 = scmp.eq.s32.totalorder %s41, 0
      %p198 = por %p196, %p197
      %p199 = scmp.ne.s32.totalorder %s187, %s188
      %p200 = scmp.eq.s32.totalorder %s42, 1
      %p201 = por %p199, %p200
      %p203 = scmp.ne.s32.totalorder %s188, %s202
      %p204 = scmp.eq.s32.totalorder %s42, 0
      %p205 = por %p203, %p204
      %s207 = sadd.s32 %s206, 1
      %p210 = scmp.eq.s32.totalorder %s36, 1
      %p211 = scmp.ne.s32.totalorder %s206, %s208
      %p212 = scmp.eq.s32.totalorder %s36, 0
      %p213 = por %p211, %p212
      %p214 = scmp.ne.s32.totalorder %s206, %s208
      %p215 = scmp.eq.s32.totalorder %s41, 1
      %p216 = por %p214, %p215
      %p217 = scmp.ne.s32.totalorder %s208, %s209
      %p218 = scmp.eq.s32.totalorder %s41, 0
      %p219 = por %p217, %p218
      %p220 = scmp.ne.s32.totalorder %s208, %s209
      %p221 = scmp.eq.s32.totalorder %s42, 1
      %p222 = por %p220, %p221
      %p224 = scmp.ne.s32.totalorder %s209, %s223
      %p225 = scmp.eq.s32.totalorder %s42, 0
      %p226 = por %p224, %p225
      %s228 = sadd.s32 %s227, 1
      %p231 = scmp.eq.s32.totalorder %s36, 1
      %p232 = scmp.ne.s32.totalorder %s227, %s229
      %p233 = scmp.eq.s32.totalorder %s36, 0
      %p234 = por %p232, %p233
      %p235 = scmp.ne.s32.totalorder %s227, %s229
      %p236 = scmp.eq.s32.totalorder %s41, 1
      %p237 = por %p235, %p236
      %p238 = scmp.ne.s32.totalorder %s229, %s230
      %p239 = scmp.eq.s32.totalorder %s41, 0
      %p240 = por %p238, %p239
      %p241 = scmp.ne.s32.totalorder %s229, %s230
      %p242 = scmp.eq.s32.totalorder %s42, 1
      %p243 = por %p241, %p242
      %p245 = scmp.ne.s32.totalorder %s230, %s244
      %p246 = scmp.eq.s32.totalorder %s42, 0
      %p247 = por %p245, %p246
      %s249 = sadd.s32 %s248, 1
      %p252 = scmp.eq.s32.totalorder %s36, 1
      %p253 = scmp.ne.s32.totalorder %s248, %s250
      %p254 = scmp.eq.s32.totalorder %s36, 0
      %p255 = por %p253, %p254
      %p256 = scmp.ne.s32.totalorder %s248, %s250
      %p257 = scmp.eq.s32.totalorder %s41, 1
      %p258 = por %p256, %p257
      %p259 = scmp.ne.s32.totalorder %s250, %s251
      %p260 = scmp.eq.s32.totalorder %s41, 0
      %p261 = por %p259, %p260
      %p262 = scmp.ne.s32.totalorder %s250, %s251
      %p263 = scmp.eq.s32.totalorder %s42, 1
      %p264 = por %p262, %p263
      %p266 = scmp.ne.s32.totalorder %s251, %s265
      %p267 = scmp.eq.s32.totalorder %s42, 0
      %p268 = por %p266, %p267
      %s270 = sadd.s32 %s269, 1
      %p273 = scmp.eq.s32.totalorder %s36, 1
      %p274 = scmp.ne.s32.totalorder %s269, %s271
      %p275 = scmp.eq.s32.totalorder %s36, 0
      %p276 = por %p274, %p275
      %p277 = scmp.ne.s32.totalorder %s269, %s271
      %p278 = scmp.eq.s32.totalorder %s41, 1
      %p279 = por %p277, %p278
      %p280 = scmp.ne.s32.totalorder %s271, %s272
      %p281 = scmp.eq.s32.totalorder %s41, 0
      %p282 = por %p280, %p281
      %p283 = scmp.ne.s32.totalorder %s271, %s272
      %p284 = scmp.eq.s32.totalorder %s42, 1
      %p285 = por %p283, %p284
      %p287 = scmp.ne.s32.totalorder %s272, %s286
      %p288 = scmp.eq.s32.totalorder %s42, 0
      %p289 = por %p287, %p288
      %s291 = sadd.s32 %s290, 1
      %p294 = scmp.eq.s32.totalorder %s36, 1
      %p295 = scmp.ne.s32.totalorder %s290, %s292
      %p296 = scmp.eq.s32.totalorder %s36, 0
      %p297 = por %p295, %p296
      %p298 = scmp.ne.s32.totalorder %s290, %s292
      %p299 = scmp.eq.s32.totalorder %s41, 1
      %p300 = por %p298, %p299
      %p301 = scmp.ne.s32.totalorder %s292, %s293
      %p302 = scmp.eq.s32.totalorder %s41, 0
      %p303 = por %p301, %p302
      %p304 = scmp.ne.s32.totalorder %s292, %s293
      %p305 = scmp.eq.s32.totalorder %s42, 1
      %p306 = por %p304, %p305
      %p308 = scmp.ne.s32.totalorder %s293, %s307
      %p309 = scmp.eq.s32.totalorder %s42, 0
      %p310 = por %p308, %p309
      %s312 = sadd.s32 %s311, 1
      %p315 = scmp.eq.s32.totalorder %s36, 1
      %p316 = scmp.ne.s32.totalorder %s311, %s313
      %p317 = scmp.eq.s32.totalorder %s36, 0
      %p318 = por %p316, %p317
      %p319 = scmp.ne.s32.totalorder %s311, %s313
      %p320 = scmp.eq.s32.totalorder %s41, 1
      %p321 = por %p319, %p320
      %p322 = scmp.ne.s32.totalorder %s313, %s314
      %p323 = scmp.eq.s32.totalorder %s41, 0
      %p324 = por %p322, %p323
      %p325 = scmp.ne.s32.totalorder %s313, %s314
      %p326 = scmp.eq.s32.totalorder %s42, 1
      %p327 = por %p325, %p326
      %p329 = scmp.ne.s32.totalorder %s314, %s328
      %p330 = scmp.eq.s32.totalorder %s42, 0
      %p331 = por %p329, %p330
      %s333 = sadd.s32 %s332, 1
      %p336 = scmp.eq.s32.totalorder %s36, 1
      %p337 = scmp.ne.s32.totalorder %s332, %s334
      %p338 = scmp.eq.s32.totalorder %s36, 0
      %p339 = por %p337, %p338
      %p340 = scmp.ne.s32.totalorder %s332, %s334
      %p341 = scmp.eq.s32.totalorder %s41, 1
      %p342 = por %p340, %p341
      %p343 = scmp.ne.s32.totalorder %s334, %s335
      %p344 = scmp.eq.s32.totalorder %s41, 0
      %p345 = por %p343, %p344
      %p346 = scmp.ne.s32.totalorder %s334, %s335
      %p347 = scmp.eq.s32.totalorder %s42, 1
      %p348 = por %p346, %p347
      %p350 = scmp.ne.s32.totalorder %s335, %s349
      %p351 = scmp.eq.s32.totalorder %s42, 0
      %p352 = por %p350, %p351
      %s354 = sadd.s32 %s353, 1
      %p357 = scmp.eq.s32.totalorder %s36, 1
      %p358 = scmp.ne.s32.totalorder %s353, %s355
      %p359 = scmp.eq.s32.totalorder %s36, 0
      %p360 = por %p358, %p359
      %p361 = scmp.ne.s32.totalorder %s353, %s355
      %p362 = scmp.eq.s32.totalorder %s41, 1
      %p363 = por %p361, %p362
      %p364 = scmp.ne.s32.totalorder %s355, %s356
      %p365 = scmp.eq.s32.totalorder %s41, 0
      %p366 = por %p364, %p365
      %p367 = scmp.ne.s32.totalorder %s355, %s356
      %p368 = scmp.eq.s32.totalorder %s42, 1
      %p369 = por %p367, %p368
      %p371 = scmp.ne.s32.totalorder %s356, %s370
      %p372 = scmp.eq.s32.totalorder %s42, 0
      %p373 = por %p371, %p372
      %s375 = sadd.s32 %s374, 1
      %p378 = scmp.eq.s32.totalorder %s36, 1
      %p379 = scmp.ne.s32.totalorder %s374, %s376
      %p380 = scmp.eq.s32.totalorder %s36, 0
      %p381 = por %p379, %p380
      %p382 = scmp.ne.s32.totalorder %s374, %s376
      %p383 = scmp.eq.s32.totalorder %s41, 1
      %p384 = por %p382, %p383
      %p385 = scmp.ne.s32.totalorder %s376, %s377
      %p386 = scmp.eq.s32.totalorder %s41, 0
      %p387 = por %p385, %p386
      %p388 = scmp.ne.s32.totalorder %s376, %s377
      %p389 = scmp.eq.s32.totalorder %s42, 1
      %p390 = por %p388, %p389
      %p392 = scmp.ne.s32.totalorder %s377, %s391
      %p393 = scmp.eq.s32.totalorder %s42, 0
      %p394 = por %p392, %p393
      %s396 = sadd.s32 %s395, 1
      %p399 = scmp.eq.s32.totalorder %s36, 1
      %p400 = scmp.ne.s32.totalorder %s395, %s397
      %p401 = scmp.eq.s32.totalorder %s36, 0
      %p402 = por %p400, %p401
      %p403 = scmp.ne.s32.totalorder %s395, %s397
      %p404 = scmp.eq.s32.totalorder %s41, 1
      %p405 = por %p403, %p404
      %p406 = scmp.ne.s32.totalorder %s397, %s398
      %p407 = scmp.eq.s32.totalorder %s41, 0
      %p408 = por %p406, %p407
      %p409 = scmp.ne.s32.totalorder %s397, %s398
      %p410 = scmp.eq.s32.totalorder %s42, 1
      %p411 = por %p409, %p410
      %p413 = scmp.ne.s32.totalorder %s398, %s412
      %p414 = scmp.eq.s32.totalorder %s42, 0
      %p415 = por %p413, %p414
      %s417 = sadd.s32 %s416, 1
      %p420 = scmp.eq.s32.totalorder %s36, 1
      %p421 = scmp.ne.s32.totalorder %s416, %s418
      %p422 = scmp.eq.s32.totalorder %s36, 0
      %p423 = por %p421, %p422
      %p424 = scmp.ne.s32.totalorder %s416, %s418
      %p425 = scmp.eq.s32.totalorder %s41, 1
      %p426 = por %p424, %p425
      %p427 = scmp.ne.s32.totalorder %s418, %s419
      %p428 = scmp.eq.s32.totalorder %s41, 0
      %p429 = por %p427, %p428
      %p430 = scmp.ne.s32.totalorder %s418, %s419
      %p431 = scmp.eq.s32.totalorder %s42, 1
      %p432 = por %p430, %p431
      %p434 = scmp.ne.s32.totalorder %s419, %s433
      %p435 = scmp.eq.s32.totalorder %s42, 0
      %p436 = por %p434, %p435
      %s438 = sadd.s32 %s437, 1
      %p441 = scmp.eq.s32.totalorder %s36, 1
      %p442 = scmp.ne.s32.totalorder %s437, %s439
      %p443 = scmp.eq.s32.totalorder %s36, 0
      %p444 = por %p442, %p443
      %p445 = scmp.ne.s32.totalorder %s437, %s439
      %p446 = scmp.eq.s32.totalorder %s41, 1
      %p447 = por %p445, %p446
      %p448 = scmp.ne.s32.totalorder %s439, %s440
      %p449 = scmp.eq.s32.totalorder %s41, 0
      %p450 = por %p448, %p449
      %p451 = scmp.ne.s32.totalorder %s439, %s440
      %p452 = scmp.eq.s32.totalorder %s42, 1
      %p453 = por %p451, %p452
      %p455 = scmp.ne.s32.totalorder %s440, %s454
      %p456 = scmp.eq.s32.totalorder %s42, 0
      %p457 = por %p455, %p456
      %s459 = sadd.s32 %s458, 1
      %p462 = scmp.eq.s32.totalorder %s36, 1
      %p463 = scmp.ne.s32.totalorder %s458, %s460
      %p464 = scmp.eq.s32.totalorder %s36, 0
      %p465 = por %p463, %p464
      %p466 = scmp.ne.s32.totalorder %s458, %s460
      %p467 = scmp.eq.s32.totalorder %s41, 1
      %p468 = por %p466, %p467
      %p469 = scmp.ne.s32.totalorder %s460, %s461
      %p470 = scmp.eq.s32.totalorder %s41, 0
      %p471 = por %p469, %p470
      %p472 = scmp.ne.s32.totalorder %s460, %s461
      %p473 = scmp.eq.s32.totalorder %s42, 1
      %p474 = por %p472, %p473
      %p476 = scmp.ne.s32.totalorder %s461, %s475
      %p477 = scmp.eq.s32.totalorder %s42, 0
      %p478 = por %p476, %p477
      %s480 = sadd.s32 %s479, 1
      %p483 = scmp.eq.s32.totalorder %s36, 1
      %p484 = scmp.ne.s32.totalorder %s479, %s481
      %p485 = scmp.eq.s32.totalorder %s36, 0
      %p486 = por %p484, %p485
      %p487 = scmp.ne.s32.totalorder %s479, %s481
      %p488 = scmp.eq.s32.totalorder %s41, 1
      %p489 = por %p487, %p488
      %p490 = scmp.ne.s32.totalorder %s481, %s482
      %p491 = scmp.eq.s32.totalorder %s41, 0
      %p492 = por %p490, %p491
      %p493 = scmp.ne.s32.totalorder %s481, %s482
      %p494 = scmp.eq.s32.totalorder %s42, 1
      %p495 = por %p493, %p494
      %p497 = scmp.ne.s32.totalorder %s482, %s496
      %p498 = scmp.eq.s32.totalorder %s42, 0
      %p499 = por %p497, %p498
      %s500 = ssub.s32 %s43, %s55
      %s501 = ssub.s32 %s44, %s51
      %s502 = sor.u32 %s500, %s501
      %p503 = scmp.eq.s32.totalorder %s502, 0
      %s505 = sadd.s32 %s504, 1
      %s506 = scalar_select %p503, %s504, %s505
      %p509 = pneg %p503
      %p510 = scmp.eq.s32.totalorder %s36, 1
      %p511 = por %p509, %p510
      %p512 = scmp.ne.s32.totalorder %s504, %s507
      %p513 = scmp.eq.s32.totalorder %s36, 0
      %p514 = por %p512, %p513
      %p515 = scmp.ne.s32.totalorder %s504, %s507
      %p516 = scmp.eq.s32.totalorder %s41, 1
      %p517 = por %p515, %p516
      %p518 = scmp.ne.s32.totalorder %s507, %s508
      %p519 = scmp.eq.s32.totalorder %s41, 0
      %p520 = por %p518, %p519
      %p521 = scmp.ne.s32.totalorder %s507, %s508
      %p522 = scmp.eq.s32.totalorder %s42, 1
      %p523 = por %p521, %p522
      %p525 = scmp.ne.s32.totalorder %s508, %s524
      %p526 = scmp.eq.s32.totalorder %s42, 0
      %p527 = por %p525, %p526
      %p528 = scmp.le.s32.totalorder 1, %s36
      %p529 = scmp.lt.s32.totalorder %s36, 3
      %p530 = pnand %p528, %p529
      %p531 = pneg %p530
      // Predicated region
      $region9: #{tpu_custom_call.1} parent=5 // pred_check
        _
      $region10: #{tpu_custom_call.1} parent=5 // pred_check_branch
        %533 = sbr.rel (%p530) target = $region12
      $region11: #{tpu_custom_call.1} parent=5 // pred_region
        %s534 = ssub.s32 %s36, 1
        // Predicated region
        $region13: #{tpu_custom_call.1} parent=11 // pred_check
          %p535 = pneg %p177
        $region14: #{tpu_custom_call.1} parent=11 // pred_check_branch
          %537 = sbr.rel (%p535) target = $region16
        $region15: #{tpu_custom_call.1} parent=11 // pred_region
          _
        $region16: #{tpu_custom_call.1} parent=11 // pred_fallthru
          _
        // Predicated region
        $region17: #{tpu_custom_call.1} parent=11 // pred_check
          %p538 = pneg %p198
        $region18: #{tpu_custom_call.1} parent=11 // pred_check_branch
          %540 = sbr.rel (%p538) target = $region20
        $region19: #{tpu_custom_call.1} parent=11 // pred_region
          _
        $region20: #{tpu_custom_call.1} parent=11 // pred_fallthru
          _
        // Predicated region
        $region21: #{tpu_custom_call.1} parent=11 // pred_check
          %p541 = pneg %p219
        $region22: #{tpu_custom_call.1} parent=11 // pred_check_branch
          %543 = sbr.rel (%p541) target = $region24
        $region23: #{tpu_custom_call.1} parent=11 // pred_region
          %s545 = ssub.s32 256, 256
          %546 = vsyncadd [#allocation11], %s545
          %s547 = sshll.u32 [#allocation10], 4
          %s548 = int_to_ptr.vmem [resolvable:$true] %s547
          %553 = dma.hbm_to_vmem [thread:$0]  %s6, 256, %s548, [#allocation11], 64, 64, 4
        $region24: #{tpu_custom_call.1} parent=11 // pred_fallthru
          _
        // Predicated region
        $region25: #{tpu_custom_call.1} parent=11 // pred_check
          %p554 = pneg %p240
        $region26: #{tpu_custom_call.1} parent=11 // pred_check_branch
          %556 = sbr.rel (%p554) target = $region28
        $region27: #{tpu_custom_call.1} parent=11 // pred_region
          %s558 = ssub.s32 256, 256
          %559 = vsyncadd [#allocation11], %s558
          %s560 = sshll.u32 [#allocation12], 4
          %s561 = int_to_ptr.vmem [resolvable:$true] %s560
          %566 = dma.hbm_to_vmem [thread:$0]  %s7, 256, %s561, [#allocation11], 64, 64, 4
        $region28: #{tpu_custom_call.1} parent=11 // pred_fallthru
          _
        // Predicated region
        $region29: #{tpu_custom_call.1} parent=11 // pred_check
          %p567 = pneg %p261
        $region30: #{tpu_custom_call.1} parent=11 // pred_check_branch
          %569 = sbr.rel (%p567) target = $region32
        $region31: #{tpu_custom_call.1} parent=11 // pred_region
          _
        $region32: #{tpu_custom_call.1} parent=11 // pred_fallthru
          _
        // Predicated region
        $region33: #{tpu_custom_call.1} parent=11 // pred_check
          %p570 = pneg %p282
        $region34: #{tpu_custom_call.1} parent=11 // pred_check_branch
          %572 = sbr.rel (%p570) target = $region36
        $region35: #{tpu_custom_call.1} parent=11 // pred_region
          _
        $region36: #{tpu_custom_call.1} parent=11 // pred_fallthru
          _
        // Predicated region
        $region37: #{tpu_custom_call.1} parent=11 // pred_check
          %p573 = pneg %p303
        $region38: #{tpu_custom_call.1} parent=11 // pred_check_branch
          %575 = sbr.rel (%p573) target = $region40
        $region39: #{tpu_custom_call.1} parent=11 // pred_region
          _
        $region40: #{tpu_custom_call.1} parent=11 // pred_fallthru
          _
        // Predicated region
        $region41: #{tpu_custom_call.1} parent=11 // pred_check
          %p576 = pneg %p324
        $region42: #{tpu_custom_call.1} parent=11 // pred_check_branch
          %578 = sbr.rel (%p576) target = $region44
        $region43: #{tpu_custom_call.1} parent=11 // pred_region
          _
        $region44: #{tpu_custom_call.1} parent=11 // pred_fallthru
          _
        // Predicated region
        $region45: #{tpu_custom_call.1} parent=11 // pred_check
          %p579 = pneg %p345
        $region46: #{tpu_custom_call.1} parent=11 // pred_check_branch
          %581 = sbr.rel (%p579) target = $region48
        $region47: #{tpu_custom_call.1} parent=11 // pred_region
          _
        $region48: #{tpu_custom_call.1} parent=11 // pred_fallthru
          _
        // Predicated region
        $region49: #{tpu_custom_call.1} parent=11 // pred_check
          %p582 = pneg %p366
        $region50: #{tpu_custom_call.1} parent=11 // pred_check_branch
          %584 = sbr.rel (%p582) target = $region52
        $region51: #{tpu_custom_call.1} parent=11 // pred_region
          _
        $region52: #{tpu_custom_call.1} parent=11 // pred_fallthru
          _
        // Predicated region
        $region53: #{tpu_custom_call.1} parent=11 // pred_check
          %p585 = pneg %p387
        $region54: #{tpu_custom_call.1} parent=11 // pred_check_branch
          %587 = sbr.rel (%p585) target = $region56
        $region55: #{tpu_custom_call.1} parent=11 // pred_region
          _
        $region56: #{tpu_custom_call.1} parent=11 // pred_fallthru
          _
        // Predicated region
        $region57: #{tpu_custom_call.1} parent=11 // pred_check
          %p588 = pneg %p408
        $region58: #{tpu_custom_call.1} parent=11 // pred_check_branch
          %590 = sbr.rel (%p588) target = $region60
        $region59: #{tpu_custom_call.1} parent=11 // pred_region
          _
        $region60: #{tpu_custom_call.1} parent=11 // pred_fallthru
          _
        // Predicated region
        $region61: #{tpu_custom_call.1} parent=11 // pred_check
          %p591 = pneg %p429
        $region62: #{tpu_custom_call.1} parent=11 // pred_check_branch
          %593 = sbr.rel (%p591) target = $region64
        $region63: #{tpu_custom_call.1} parent=11 // pred_region
          _
        $region64: #{tpu_custom_call.1} parent=11 // pred_fallthru
          _
        // Predicated region
        $region65: #{tpu_custom_call.1} parent=11 // pred_check
          %p594 = pneg %p450
        $region66: #{tpu_custom_call.1} parent=11 // pred_check_branch
          %596 = sbr.rel (%p594) target = $region68
        $region67: #{tpu_custom_call.1} parent=11 // pred_region
          _
        $region68: #{tpu_custom_call.1} parent=11 // pred_fallthru
          _
        // Predicated region
        $region69: #{tpu_custom_call.1} parent=11 // pred_check
          %p597 = pneg %p471
        $region70: #{tpu_custom_call.1} parent=11 // pred_check_branch
          %599 = sbr.rel (%p597) target = $region72
        $region71: #{tpu_custom_call.1} parent=11 // pred_region
          _
        $region72: #{tpu_custom_call.1} parent=11 // pred_fallthru
          _
        // Predicated region
        $region73: #{tpu_custom_call.1} parent=11 // pred_check
          %p600 = pneg %p492
        $region74: #{tpu_custom_call.1} parent=11 // pred_check_branch
          %602 = sbr.rel (%p600) target = $region76
        $region75: #{tpu_custom_call.1} parent=11 // pred_region
          _
        $region76: #{tpu_custom_call.1} parent=11 // pred_fallthru
          _
      $region12: #{tpu_custom_call.1} parent=5 // pred_fallthru
        _
      %p603 = scmp.lt.s32.totalorder %s36, 2
      // Predicated region
      $region77: #{tpu_custom_call.1} parent=5 // pred_check
        %p604 = pneg %p603
      $region78: #{tpu_custom_call.1} parent=5 // pred_check_branch
        %606 = sbr.rel (%p604) target = $region80
      $region79: #{tpu_custom_call.1} parent=5 // pred_region
        // Predicated region
        $region81: #{tpu_custom_call.1} parent=79 // pred_check
          %p607 = pneg %p70
        $region82: #{tpu_custom_call.1} parent=79 // pred_check_branch
          %609 = sbr.rel (%p607) target = $region84
        $region83: #{tpu_custom_call.1} parent=79 // pred_region
          %p610 = scmp.lt.s32.totalorder %s43, 1
          %s611 = scalar_select %p610, %s43, 1
          %p612 = scmp.lt.s32.totalorder %s44, 0
          %s613 = scalar_select %p612, %s44, 0
          %s614 = sadd.s32 %s613, %s611
          %s615 = smul.addr %s614, 8
          %s616 = scalar_lea.vmem %s0, %s615
        $region84: #{tpu_custom_call.1} parent=79 // pred_fallthru
          _
        // Predicated region
        $region85: #{tpu_custom_call.1} parent=79 // pred_check
          %p617 = pneg %p98
        $region86: #{tpu_custom_call.1} parent=79 // pred_check_branch
          %619 = sbr.rel (%p617) target = $region88
        $region87: #{tpu_custom_call.1} parent=79 // pred_region
          %s620 = sand.u32 %s88, 1
          %s621 = scalar_lea.sflag [#allocation5], %s620
          %s622 = sand.u32 %s88, 1
          %s623 = smul.addr %s622, 4
          %s624 = scalar_lea.vmem [#allocation4], %s623
          %s626 = ssub.s32 64, 64
          %627 = vsyncadd %s621, %s626
          %s628 = sadd.s32 %s44, %s43
          %s629 = smul.addr %s628, 64
          %s630 = scalar_lea.hbm %s1, %s629
          %s632 = sshll.u32 %s624, 4
          %s633 = int_to_ptr.vmem [resolvable:$true] %s632
          %635 = dma.hbm_to_vmem [thread:$0]  %s630, 64, %s633, %s621
        $region88: #{tpu_custom_call.1} parent=79 // pred_fallthru
          _
        // Predicated region
        $region89: #{tpu_custom_call.1} parent=79 // pred_check
          %p636 = pneg %p124
        $region90: #{tpu_custom_call.1} parent=79 // pred_check_branch
          %638 = sbr.rel (%p636) target = $region92
        $region91: #{tpu_custom_call.1} parent=79 // pred_region
          %s639 = sand.u32 %s36, 1
          %s640 = scalar_lea.sflag [#allocation8], %s639
          %s641 = sand.u32 %s114, 1
          %s642 = smul.addr %s641, 4
          %s643 = scalar_lea.vmem [#allocation7], %s642
          %s645 = ssub.s32 64, 64
          %646 = vsyncadd %s640, %s645
          %s647 = smul.addr %s43, 64
          %s648 = scalar_lea.hbm %s2, %s647
          %s650 = sshll.u32 %s643, 4
          %s651 = int_to_ptr.vmem [resolvable:$true] %s650
          %653 = dma.hbm_to_vmem [thread:$0]  %s648, 64, %s651, %s640
        $region92: #{tpu_custom_call.1} parent=79 // pred_fallthru
          _
        // Predicated region
        $region93: #{tpu_custom_call.1} parent=79 // pred_check
          %p654 = pneg %p150
        $region94: #{tpu_custom_call.1} parent=79 // pred_check_branch
          %656 = sbr.rel (%p654) target = $region96
        $region95: #{tpu_custom_call.1} parent=79 // pred_region
          %s657 = sand.u32 %s36, 1
          %s658 = scalar_lea.sflag [#allocation8], %s657
          %s659 = sand.u32 %s140, 1
          %s660 = smul.addr %s659, 4
          %s661 = scalar_lea.vmem [#allocation9], %s660
          %s663 = ssub.s32 64, 64
          %664 = vsyncadd %s658, %s663
          %s665 = smul.addr %s43, 64
          %s666 = scalar_lea.hbm %s3, %s665
          %s668 = sshll.u32 %s661, 4
          %s669 = int_to_ptr.vmem [resolvable:$true] %s668
          %671 = dma.hbm_to_vmem [thread:$0]  %s666, 64, %s669, %s658
        $region96: #{tpu_custom_call.1} parent=79 // pred_fallthru
          _
      $region80: #{tpu_custom_call.1} parent=5 // pred_fallthru
        _
      %p672 = scmp.le.s32.totalorder 1, %s36
      %p673 = scmp.lt.s32.totalorder %s36, 3
      %p674 = pnand %p672, %p673
      %p675 = pneg %p674
      // Predicated region
      $region97: #{tpu_custom_call.1} parent=5 // pred_check
        _
      $region98: #{tpu_custom_call.1} parent=5 // pred_check_branch
        %677 = sbr.rel (%p674) target = $region100
      $region99: #{tpu_custom_call.1} parent=5 // pred_region
        %s678 = ssub.s32 %s36, 1
        %s679 = sand.u32 %s91, 1
        %s680 = scalar_lea.sflag [#allocation5], %s679
        %s681 = sand.u32 %s91, 1
        %s682 = smul.addr %s681, 4
        %s683 = scalar_lea.vmem [#allocation4], %s682
        // Predicated region
        $region101: #{tpu_custom_call.1} parent=99 // pred_check
          %p684 = pneg %p104
        $region102: #{tpu_custom_call.1} parent=99 // pred_check_branch
          %686 = sbr.rel (%p684) target = $region104
        $region103: #{tpu_custom_call.1} parent=99 // pred_region
          %687 = dma.done %s680, 64
        $region104: #{tpu_custom_call.1} parent=99 // pred_fallthru
          _
        %s688 = sand.u32 %s41, 1
        %s689 = scalar_lea.sflag [#allocation8], %s688
        %s690 = sand.u32 %s117, 1
        %s691 = smul.addr %s690, 4
        %s692 = scalar_lea.vmem [#allocation7], %s691
        // Predicated region
        $region105: #{tpu_custom_call.1} parent=99 // pred_check
          %p693 = pneg %p130
        $region106: #{tpu_custom_call.1} parent=99 // pred_check_branch
          %695 = sbr.rel (%p693) target = $region108
        $region107: #{tpu_custom_call.1} parent=99 // pred_region
          %696 = dma.done %s689, 64
        $region108: #{tpu_custom_call.1} parent=99 // pred_fallthru
          _
        %s697 = sand.u32 %s41, 1
        %s698 = scalar_lea.sflag [#allocation8], %s697
        %s699 = sand.u32 %s143, 1
        %s700 = smul.addr %s699, 4
        %s701 = scalar_lea.vmem [#allocation9], %s700
        // Predicated region
        $region109: #{tpu_custom_call.1} parent=99 // pred_check
          %p702 = pneg %p156
        $region110: #{tpu_custom_call.1} parent=99 // pred_check_branch
          %704 = sbr.rel (%p702) target = $region112
        $region111: #{tpu_custom_call.1} parent=99 // pred_region
          %705 = dma.done %s698, 64
        $region112: #{tpu_custom_call.1} parent=99 // pred_fallthru
          _
        // Predicated region
        $region113: #{tpu_custom_call.1} parent=99 // pred_check
          %p706 = pneg %p219
        $region114: #{tpu_custom_call.1} parent=99 // pred_check_branch
          %708 = sbr.rel (%p706) target = $region116
        $region115: #{tpu_custom_call.1} parent=99 // pred_region
          %709 = dma.done [#allocation11], 256
        $region116: #{tpu_custom_call.1} parent=99 // pred_fallthru
          _
        // Predicated region
        $region117: #{tpu_custom_call.1} parent=99 // pred_check
          %p710 = pneg %p240
        $region118: #{tpu_custom_call.1} parent=99 // pred_check_branch
          %712 = sbr.rel (%p710) target = $region120
        $region119: #{tpu_custom_call.1} parent=99 // pred_region
          %713 = dma.done [#allocation11], 256
        $region120: #{tpu_custom_call.1} parent=99 // pred_fallthru
          _
        %p714 = scmp.lt.s32.totalorder %s45, 1
        %s715 = scalar_select %p714, %s45, 1
        %p716 = scmp.lt.s32.totalorder %s46, 0
        %s717 = scalar_select %p716, %s46, 0
        %s718 = sadd.s32 %s717, %s715
        %s719 = smul.addr %s718, 8
        %s720 = scalar_lea.vmem %s0, %s719
        %p721 = pneg %p76
        %p722 = pneg %p73
        %s723 = sand.u32 %s91, 1
        %s724 = scalar_lea.sflag [#allocation5], %s723
        %s725 = sand.u32 %s91, 1
        %s726 = smul.addr %s725, 4
        %s727 = scalar_lea.vmem [#allocation4], %s726
        %p728 = pneg %p104
        %p729 = pneg %p101
        %s730 = sand.u32 %s41, 1
        %s731 = scalar_lea.sflag [#allocation8], %s730
        %s732 = sand.u32 %s117, 1
        %s733 = smul.addr %s732, 4
        %s734 = scalar_lea.vmem [#allocation7], %s733
        %p735 = pneg %p130
        %p736 = pneg %p127
        %s737 = sand.u32 %s41, 1
        %s738 = scalar_lea.sflag [#allocation8], %s737
        %s739 = sand.u32 %s143, 1
        %s740 = smul.addr %s739, 4
        %s741 = scalar_lea.vmem [#allocation9], %s740
        %p742 = pneg %p156
        %p743 = pneg %p153
        %p744 = pneg %p177
        %p745 = pneg %p174
        %p746 = pneg %p198
        %p747 = pneg %p195
        %p748 = pneg %p219
        %p749 = pneg %p216
        %p750 = pneg %p240
        %p751 = pneg %p237
        %p752 = pneg %p261
        %p753 = pneg %p258
        %p754 = pneg %p282
        %p755 = pneg %p279
        %p756 = pneg %p303
        %p757 = pneg %p300
        %p758 = pneg %p324
        %p759 = pneg %p321
        %p760 = pneg %p345
        %p761 = pneg %p342
        %p762 = pneg %p366
        %p763 = pneg %p363
        %p764 = pneg %p387
        %p765 = pneg %p384
        %p766 = pneg %p408
        %p767 = pneg %p405
        %p768 = pneg %p429
        %p769 = pneg %p426
        %p770 = pneg %p450
        %p771 = pneg %p447
        %p772 = pneg %p471
        %p773 = pneg %p468
        %p774 = pneg %p492
        %p775 = pneg %p489
        %p776 = pneg %p520
        %p777 = pneg %p517
        %s778 = sand.u32 %s507, 1
        %s779 = scalar_lea.sflag [#allocation6], %s778
        %s780 = sand.u32 %s507, 1
        %s781 = smul.addr %s780, 8
        %s782 = scalar_lea.vmem [#allocation13], %s781
        %p783 = scmp.lt.s32.totalorder %s45, 1
        %s784 = scalar_select %p783, %s45, 1
        %p785 = scmp.lt.s32.totalorder %s46, 0
        %s786 = scalar_select %p785, %s46, 0
        %s787 = sadd.s32 %s786, %s784
        %s788 = smul.addr %s787, 8
        %s789 = scalar_lea.vmem %s0, %s788
        %p791 = scmp.eq.s32.totalorder %s46, 0
        // Predicated region
        $region121: #{tpu_custom_call.1} parent=99 // pred_check
          %p792 = pneg %p791
        $region122: #{tpu_custom_call.1} parent=99 // pred_check_branch
          %794 = sbr.rel (%p792) target = $region124
        $region123: #{tpu_custom_call.1} parent=99 // pred_region
          %v795 = vld [vmem:[%s692] sm:$0xf]
          %v796 = vld [vmem:[%s701] sm:$0xf]
          %v797 = vadd.bf16 %v795, %v796
          %v798 = vld [vmem:[%s5] sm:$0xf]
          %v799 = vld [vmem:[%s5 + $0x4] sm:$0xf]
          %v800 = vld [vmem:[%s5 + $0x8] sm:$0xf]
          %v801 = vld [vmem:[%s5 + $0xc] sm:$0xf]
          %v802 = vld [vmem:[%s9] sm:$0x1]
          %v804 = vlaneseq
          %v805 = vshrl.u32 %v804, 7
          %v806 = vsub.s32 0, %v805
          %v807 = vrot.slane %v802, %v806
          %v813 = vunpack.c.l.b16 %v798
          %v814 = vunpack.c.l.b16 %v799
          %v815 = vunpack.c.l.b16 %v800
          %v816 = vunpack.c.l.b16 %v801
          %v817 = vpack.c.b16 %v814, %v813
          %v818 = vpack.c.b16 %v816, %v815
          %vm821 = vcmask 261120
          %v823 = vsel %vm821, %v797, 0
          %825 = vmatprep.subr.bf16.mxu0 0
          %826 = vmatpush1.bf16.msra.mxu0 %v817
          %827 = vmatprep.subr.bf16.mxu0 0
          %828 = vmatpush1.bf16.msra.mxu0 %v818
          %829 = vmatprep.subr.bf16.mxu0 0
          %830 = vmatpush1.bf16.msra.mxu0 0
          %831 = vmatprep.subr.bf16.mxu0 0
          %832 = vmatpush1.bf16.msra.mxu0 0
          %833 = vmatprep.subr.bf16.mxu0 0
          %834 = vmatpush1.bf16.msra.mxu0 0
          %835 = vmatprep.subr.bf16.mxu0 0
          %836 = vmatpush1.bf16.msra.mxu0 0
          %837 = vmatprep.subr.bf16.mxu0 0
          %838 = vmatpush1.bf16.msra.mxu0 0
          %839 = vmatprep.subr.bf16.mxu0 0
          %840 = vmatpush1.bf16.msra.mxu0 0
          %841 = vmatprep.subr.bf16.mxu0 0
          %842 = vmatpush1.bf16.msra.mxu0 0
          %843 = vmatprep.subr.bf16.mxu0 0
          %844 = vmatpush1.bf16.msra.mxu0 0
          %845 = vmatprep.subr.bf16.mxu0 0
          %846 = vmatpush1.bf16.msra.mxu0 0
          %847 = vmatprep.subr.bf16.mxu0 0
          %848 = vmatpush1.bf16.msra.mxu0 0
          %849 = vmatprep.subr.bf16.mxu0 0
          %850 = vmatpush1.bf16.msra.mxu0 0
          %851 = vmatprep.subr.bf16.mxu0 0
          %852 = vmatpush1.bf16.msra.mxu0 0
          %853 = vmatprep.subr.bf16.mxu0 0
          %854 = vmatpush1.bf16.msra.mxu0 0
          %855 = vmatprep.subr.bf16.mxu0 0
          %856 = vmatpush1.bf16.msra.mxu0 0
          %857 = vmatprep.mubr.bf16.mxu0 0
          %858 = vmatmul.mubr.bf16.gmra.mrb[0].mxu0 %v823
          %v859 = vpop.f32.mrb[0].mxu0
          %v860 = vadd.f32 %v807, %v859
          %v861 = vpop.f32.mrb[0].mxu0
          %v862 = vpop.f32.mrb[0].mxu0
          %v863 = vpop.f32.mrb[0].mxu0
          %864 = vdwg.mxu0
          %v865 = vld [vmem:[#allocation10] sm:$0xf]
          %v866 = vld [vmem:[#allocation10 + $0x4] sm:$0xf]
          %v867 = vld [vmem:[#allocation10 + $0x8] sm:$0xf]
          %v868 = vld [vmem:[#allocation10 + $0xc] sm:$0xf]
          %v869 = vld [vmem:[%s10] sm:$0x1]
          %v871 = vlaneseq
          %v872 = vshrl.u32 %v871, 7
          %v873 = vsub.s32 0, %v872
          %v874 = vrot.slane %v869, %v873
          %v880 = vunpack.c.l.b16 %v865
          %v881 = vunpack.c.l.b16 %v866
          %v882 = vunpack.c.l.b16 %v867
          %v883 = vunpack.c.l.b16 %v868
          %v884 = vpack.c.b16 %v881, %v880
          %v885 = vpack.c.b16 %v883, %v882
          %v889 = vsel %vm821, %v795, 0
          %891 = vmatprep.subr.bf16.mxu0 0
          %892 = vmatpush1.bf16.msra.mxu0 %v884
          %893 = vmatprep.subr.bf16.mxu0 0
          %894 = vmatpush1.bf16.msra.mxu0 %v885
          %895 = vmatprep.subr.bf16.mxu0 0
          %896 = vmatpush1.bf16.msra.mxu0 0
          %897 = vmatprep.subr.bf16.mxu0 0
          %898 = vmatpush1.bf16.msra.mxu0 0
          %899 = vmatprep.subr.bf16.mxu0 0
          %900 = vmatpush1.bf16.msra.mxu0 0
          %901 = vmatprep.subr.bf16.mxu0 0
          %902 = vmatpush1.bf16.msra.mxu0 0
          %903 = vmatprep.subr.bf16.mxu0 0
          %904 = vmatpush1.bf16.msra.mxu0 0
          %905 = vmatprep.subr.bf16.mxu0 0
          %906 = vmatpush1.bf16.msra.mxu0 0
          %907 = vmatprep.subr.bf16.mxu0 0
          %908 = vmatpush1.bf16.msra.mxu0 0
          %909 = vmatprep.subr.bf16.mxu0 0
          %910 = vmatpush1.bf16.msra.mxu0 0
          %911 = vmatprep.subr.bf16.mxu0 0
          %912 = vmatpush1.bf16.msra.mxu0 0
          %913 = vmatprep.subr.bf16.mxu0 0
          %914 = vmatpush1.bf16.msra.mxu0 0
          %915 = vmatprep.subr.bf16.mxu0 0
          %916 = vmatpush1.bf16.msra.mxu0 0
          %917 = vmatprep.subr.bf16.mxu0 0
          %918 = vmatpush1.bf16.msra.mxu0 0
          %919 = vmatprep.subr.bf16.mxu0 0
          %920 = vmatpush1.bf16.msra.mxu0 0
          %921 = vmatprep.subr.bf16.mxu0 0
          %922 = vmatpush1.bf16.msra.mxu0 0
          %923 = vmatprep.mubr.bf16.mxu0 0
          %924 = vmatmul.mubr.bf16.gmra.mrb[0].mxu0 %v889
          %v925 = vpop.f32.mrb[0].mxu0
          %v926 = vadd.f32 %v874, %v925
          %v927 = vpop.f32.mrb[0].mxu0
          %v928 = vpop.f32.mrb[0].mxu0
          %v929 = vpop.f32.mrb[0].mxu0
          %930 = vdwg.mxu0
          %932 = vrot.lane.b32.xlu0 %v860, 120
          %v933 = vpop.permute.xlu0 %932
          %935 = vrot.lane.b32.xlu0 %v860, 112
          %v936 = vpop.permute.xlu0 %935
          %938 = vrot.lane.b32.xlu0 %v860, 104
          %v939 = vpop.permute.xlu0 %938
          %v941 = vcombine.low %v860, %v936
          %v942 = vcombine.high %v860, %v936
          %v944 = vunpack.c.l.s4 1983009808
          %v945 = vunpack.c.0.s8 %v944
          %v946 = vlaneseq
          %v947 = vshrl.u32 %v946, 7
          %v948 = vsub.s32 %v945, %v947
          %v949 = vrot.slane %v941, %v948
          %v951 = vunpack.c.l.s4 1983009808
          %v952 = vunpack.c.0.s8 %v951
          %v953 = vlaneseq
          %v954 = vshrl.u32 %v953, 7
          %v955 = vsub.s32 %v952, %v954
          %v956 = vrot.slane %v942, %v955
          %v957 = vcombine.low %v933, %v939
          %v958 = vcombine.high %v933, %v939
          %v960 = vunpack.c.l.s4 1983009808
          %v961 = vunpack.c.0.s8 %v960
          %v962 = vlaneseq
          %v963 = vshrl.u32 %v962, 7
          %v964 = vsub.s32 %v961, %v963
          %v965 = vrot.slane %v957, %v964
          %v967 = vunpack.c.l.s4 1983009808
          %v968 = vunpack.c.0.s8 %v967
          %v969 = vlaneseq
          %v970 = vshrl.u32 %v969, 7
          %v971 = vsub.s32 %v968, %v970
          %v972 = vrot.slane %v958, %v971
          %v973 = vcombine.low %v949, %v965
          %v974 = vcombine.high %v949, %v965
          %v976 = vunpack.c.l.s4 1934713408
          %v977 = vunpack.c.0.s8 %v976
          %v978 = vlaneseq
          %v979 = vshrl.u32 %v978, 7
          %v980 = vsub.s32 %v977, %v979
          %v981 = vrot.slane %v973, %v980
          %v983 = vunpack.c.l.s4 1934713408
          %v984 = vunpack.c.0.s8 %v983
          %v985 = vlaneseq
          %v986 = vshrl.u32 %v985, 7
          %v987 = vsub.s32 %v984, %v986
          %v988 = vrot.slane %v974, %v987
          %v989 = vcombine.low %v956, %v972
          %v990 = vcombine.high %v956, %v972
          %v992 = vunpack.c.l.s4 1934713408
          %v993 = vunpack.c.0.s8 %v992
          %v994 = vlaneseq
          %v995 = vshrl.u32 %v994, 7
          %v996 = vsub.s32 %v993, %v995
          %v997 = vrot.slane %v989, %v996
          %v999 = vunpack.c.l.s4 1934713408
          %v1000 = vunpack.c.0.s8 %v999
          %v1001 = vlaneseq
          %v1002 = vshrl.u32 %v1001, 7
          %v1003 = vsub.s32 %v1000, %v1002
          %v1004 = vrot.slane %v990, %v1003
          %v1005 = vcombine.high %v981, 0.0
          %v1006 = vcombine.high %v988, 0.0
          %v1007 = vcombine.high %v997, 0.0
          %v1008 = vcombine.high %v1004, 0.0
          %v1009 = vcombine.low %v981, %v988
          %v1011 = vunpack.c.l.s4 1983009808
          %v1012 = vunpack.c.0.s8 %v1011
          %v1013 = vlaneseq
          %v1014 = vshrl.u32 %v1013, 7
          %v1015 = vsub.s32 %v1012, %v1014
          %v1016 = vrot.slane %v1009, %v1015
          %v1017 = vcombine.low %v1005, %v1006
          %v1019 = vunpack.c.l.s4 1983009808
          %v1020 = vunpack.c.0.s8 %v1019
          %v1021 = vlaneseq
          %v1022 = vshrl.u32 %v1021, 7
          %v1023 = vsub.s32 %v1020, %v1022
          %v1024 = vrot.slane %v1017, %v1023
          %v1025 = vcombine.low %v997, %v1004
          %v1027 = vunpack.c.l.s4 1983009808
          %v1028 = vunpack.c.0.s8 %v1027
          %v1029 = vlaneseq
          %v1030 = vshrl.u32 %v1029, 7
          %v1031 = vsub.s32 %v1028, %v1030
          %v1032 = vrot.slane %v1025, %v1031
          %v1033 = vcombine.low %v1007, %v1008
          %v1035 = vunpack.c.l.s4 1983009808
          %v1036 = vunpack.c.0.s8 %v1035
          %v1037 = vlaneseq
          %v1038 = vshrl.u32 %v1037, 7
          %v1039 = vsub.s32 %v1036, %v1038
          %v1040 = vrot.slane %v1033, %v1039
          %v1041 = vcombine.low %v1016, %v1024
          %v1042 = vcombine.high %v1016, %v1024
          %v1044 = vunpack.c.l.s4 1934713408
          %v1045 = vunpack.c.0.s8 %v1044
          %v1046 = vlaneseq
          %v1047 = vshrl.u32 %v1046, 7
          %v1048 = vsub.s32 %v1045, %v1047
          %v1049 = vrot.slane %v1041, %v1048
          %v1051 = vunpack.c.l.s4 1934713408
          %v1052 = vunpack.c.0.s8 %v1051
          %v1053 = vlaneseq
          %v1054 = vshrl.u32 %v1053, 7
          %v1055 = vsub.s32 %v1052, %v1054
          %v1056 = vrot.slane %v1042, %v1055
          %v1057 = vcombine.low %v1032, %v1040
          %v1058 = vcombine.high %v1032, %v1040
          %v1060 = vunpack.c.l.s4 1934713408
          %v1061 = vunpack.c.0.s8 %v1060
          %v1062 = vlaneseq
          %v1063 = vshrl.u32 %v1062, 7
          %v1064 = vsub.s32 %v1061, %v1063
          %v1065 = vrot.slane %v1057, %v1064
          %v1067 = vunpack.c.l.s4 1934713408
          %v1068 = vunpack.c.0.s8 %v1067
          %v1069 = vlaneseq
          %v1070 = vshrl.u32 %v1069, 7
          %v1071 = vsub.s32 %v1068, %v1070
          %v1072 = vrot.slane %v1058, %v1071
          %v1073 = vcombine.low %v1049, %v1065
          %v1074 = vcombine.high %v1049, %v1065
          %v1075 = vcombine.low %v1056, %v1072
          %v1076 = vcombine.high %v1056, %v1072
          %v1077 = vpack.c.bf16 %v1073, %v1073
          %v1078 = vpack.c.bf16 %v1074, %v1074
          %v1079 = vpack.c.bf16 %v1075, %v1075
          %v1080 = vpack.c.bf16 %v1076, %v1076
          %vm1081 = vcmask 60416
          %1082 = vst.msk [vmem:[#allocation2] sm:$0xf] %vm1081, %v1077
          %1083 = vst.msk [vmem:[#allocation2 + $0x4] sm:$0xf] %vm1081, %v1078
          %1084 = vst.msk [vmem:[#allocation2 + $0x8] sm:$0xf] %vm1081, %v1079
          %1085 = vst.msk [vmem:[#allocation2 + $0xc] sm:$0xf] %vm1081, %v1080
          %1087 = vrot.lane.b32.xlu0 %v926, 120
          %v1088 = vpop.permute.xlu0 %1087
          %1090 = vrot.lane.b32.xlu0 %v926, 112
          %v1091 = vpop.permute.xlu0 %1090
          %1093 = vrot.lane.b32.xlu0 %v926, 104
          %v1094 = vpop.permute.xlu0 %1093
          %v1096 = vcombine.low %v926, %v1091
          %v1097 = vcombine.high %v926, %v1091
          %v1099 = vunpack.c.l.s4 1983009808
          %v1100 = vunpack.c.0.s8 %v1099
          %v1101 = vlaneseq
          %v1102 = vshrl.u32 %v1101, 7
          %v1103 = vsub.s32 %v1100, %v1102
          %v1104 = vrot.slane %v1096, %v1103
          %v1106 = vunpack.c.l.s4 1983009808
          %v1107 = vunpack.c.0.s8 %v1106
          %v1108 = vlaneseq
          %v1109 = vshrl.u32 %v1108, 7
          %v1110 = vsub.s32 %v1107, %v1109
          %v1111 = vrot.slane %v1097, %v1110
          %v1112 = vcombine.low %v1088, %v1094
          %v1113 = vcombine.high %v1088, %v1094
          %v1115 = vunpack.c.l.s4 1983009808
          %v1116 = vunpack.c.0.s8 %v1115
          %v1117 = vlaneseq
          %v1118 = vshrl.u32 %v1117, 7
          %v1119 = vsub.s32 %v1116, %v1118
          %v1120 = vrot.slane %v1112, %v1119
          %v1122 = vunpack.c.l.s4 1983009808
          %v1123 = vunpack.c.0.s8 %v1122
          %v1124 = vlaneseq
          %v1125 = vshrl.u32 %v1124, 7
          %v1126 = vsub.s32 %v1123, %v1125
          %v1127 = vrot.slane %v1113, %v1126
          %v1128 = vcombine.low %v1104, %v1120
          %v1129 = vcombine.high %v1104, %v1120
          %v1131 = vunpack.c.l.s4 1934713408
          %v1132 = vunpack.c.0.s8 %v1131
          %v1133 = vlaneseq
          %v1134 = vshrl.u32 %v1133, 7
          %v1135 = vsub.s32 %v1132, %v1134
          %v1136 = vrot.slane %v1128, %v1135
          %v1138 = vunpack.c.l.s4 1934713408
          %v1139 = vunpack.c.0.s8 %v1138
          %v1140 = vlaneseq
          %v1141 = vshrl.u32 %v1140, 7
          %v1142 = vsub.s32 %v1139, %v1141
          %v1143 = vrot.slane %v1129, %v1142
          %v1144 = vcombine.low %v1111, %v1127
          %v1145 = vcombine.high %v1111, %v1127
          %v1147 = vunpack.c.l.s4 1934713408
          %v1148 = vunpack.c.0.s8 %v1147
          %v1149 = vlaneseq
          %v1150 = vshrl.u32 %v1149, 7
          %v1151 = vsub.s32 %v1148, %v1150
          %v1152 = vrot.slane %v1144, %v1151
          %v1154 = vunpack.c.l.s4 1934713408
          %v1155 = vunpack.c.0.s8 %v1154
          %v1156 = vlaneseq
          %v1157 = vshrl.u32 %v1156, 7
          %v1158 = vsub.s32 %v1155, %v1157
          %v1159 = vrot.slane %v1145, %v1158
          %v1160 = vcombine.high %v1136, 0.0
          %v1161 = vcombine.high %v1143, 0.0
          %v1162 = vcombine.high %v1152, 0.0
          %v1163 = vcombine.high %v1159, 0.0
          %v1164 = vcombine.low %v1136, %v1143
          %v1166 = vunpack.c.l.s4 1983009808
          %v1167 = vunpack.c.0.s8 %v1166
          %v1168 = vlaneseq
          %v1169 = vshrl.u32 %v1168, 7
          %v1170 = vsub.s32 %v1167, %v1169
          %v1171 = vrot.slane %v1164, %v1170
          %v1172 = vcombine.low %v1160, %v1161
          %v1174 = vunpack.c.l.s4 1983009808
          %v1175 = vunpack.c.0.s8 %v1174
          %v1176 = vlaneseq
          %v1177 = vshrl.u32 %v1176, 7
          %v1178 = vsub.s32 %v1175, %v1177
          %v1179 = vrot.slane %v1172, %v1178
          %v1180 = vcombine.low %v1152, %v1159
          %v1182 = vunpack.c.l.s4 1983009808
          %v1183 = vunpack.c.0.s8 %v1182
          %v1184 = vlaneseq
          %v1185 = vshrl.u32 %v1184, 7
          %v1186 = vsub.s32 %v1183, %v1185
          %v1187 = vrot.slane %v1180, %v1186
          %v1188 = vcombine.low %v1162, %v1163
          %v1190 = vunpack.c.l.s4 1983009808
          %v1191 = vunpack.c.0.s8 %v1190
          %v1192 = vlaneseq
          %v1193 = vshrl.u32 %v1192, 7
          %v1194 = vsub.s32 %v1191, %v1193
          %v1195 = vrot.slane %v1188, %v1194
          %v1196 = vcombine.low %v1171, %v1179
          %v1197 = vcombine.high %v1171, %v1179
          %v1199 = vunpack.c.l.s4 1934713408
          %v1200 = vunpack.c.0.s8 %v1199
          %v1201 = vlaneseq
          %v1202 = vshrl.u32 %v1201, 7
          %v1203 = vsub.s32 %v1200, %v1202
          %v1204 = vrot.slane %v1196, %v1203
          %v1206 = vunpack.c.l.s4 1934713408
          %v1207 = vunpack.c.0.s8 %v1206
          %v1208 = vlaneseq
          %v1209 = vshrl.u32 %v1208, 7
          %v1210 = vsub.s32 %v1207, %v1209
          %v1211 = vrot.slane %v1197, %v1210
          %v1212 = vcombine.low %v1187, %v1195
          %v1213 = vcombine.high %v1187, %v1195
          %v1215 = vunpack.c.l.s4 1934713408
          %v1216 = vunpack.c.0.s8 %v1215
          %v1217 = vlaneseq
          %v1218 = vshrl.u32 %v1217, 7
          %v1219 = vsub.s32 %v1216, %v1218
          %v1220 = vrot.slane %v1212, %v1219
          %v1222 = vunpack.c.l.s4 1934713408
          %v1223 = vunpack.c.0.s8 %v1222
          %v1224 = vlaneseq
          %v1225 = vshrl.u32 %v1224, 7
          %v1226 = vsub.s32 %v1223, %v1225
          %v1227 = vrot.slane %v1213, %v1226
          %v1228 = vcombine.low %v1204, %v1220
          %v1229 = vcombine.high %v1204, %v1220
          %v1230 = vcombine.low %v1211, %v1227
          %v1231 = vcombine.high %v1211, %v1227
          %v1232 = vpack.c.bf16 %v1228, %v1228
          %v1233 = vpack.c.bf16 %v1229, %v1229
          %v1234 = vpack.c.bf16 %v1230, %v1230
          %v1235 = vpack.c.bf16 %v1231, %v1231
          %1236 = vst.msk [vmem:[#allocation3] sm:$0xf] %vm1081, %v1232
          %1237 = vst.msk [vmem:[#allocation3 + $0x4] sm:$0xf] %vm1081, %v1233
          %1238 = vst.msk [vmem:[#allocation3 + $0x8] sm:$0xf] %vm1081, %v1234
          %1239 = vst.msk [vmem:[#allocation3 + $0xc] sm:$0xf] %vm1081, %v1235
        $region124: #{tpu_custom_call.1} parent=99 // pred_fallthru
          _
        %v1240 = vld [vmem:[%s789] sm:$0xff]
        %v1241 = vld [vmem:[%s683] sm:$0xf]
        %v1242 = vunpack.c.l.bf16 %v1241
        %v1243 = vadd.f32 %v1240, %v1242
        %v1244 = vpack.c.bf16 %v1243, %v1243
        %v1245 = vld [vmem:[%s4] sm:$0xf]
        %v1246 = vld [vmem:[%s4 + $0x4] sm:$0xf]
        %v1247 = vld [vmem:[%s4 + $0x8] sm:$0xf]
        %v1248 = vld [vmem:[%s4 + $0xc] sm:$0xf]
        %v1249 = vld [vmem:[%s8] sm:$0x1]
        %v1251 = vlaneseq
        %v1252 = vshrl.u32 %v1251, 7
        %v1253 = vsub.s32 0, %v1252
        %v1254 = vrot.slane %v1249, %v1253
        %v1260 = vunpack.c.l.b16 %v1245
        %v1261 = vunpack.c.l.b16 %v1246
        %v1262 = vunpack.c.l.b16 %v1247
        %v1263 = vunpack.c.l.b16 %v1248
        %v1264 = vpack.c.b16 %v1261, %v1260
        %v1265 = vpack.c.b16 %v1263, %v1262
        %vm1268 = vcmask 261120
        %v1270 = vsel %vm1268, %v1244, 0
        %1272 = vmatprep.subr.bf16.mxu0 0
        %1273 = vmatpush1.bf16.msra.mxu0 %v1264
        %1274 = vmatprep.subr.bf16.mxu0 0
        %1275 = vmatpush1.bf16.msra.mxu0 %v1265
        %1276 = vmatprep.subr.bf16.mxu0 0
        %1277 = vmatpush1.bf16.msra.mxu0 0
        %1278 = vmatprep.subr.bf16.mxu0 0
        %1279 = vmatpush1.bf16.msra.mxu0 0
        %1280 = vmatprep.subr.bf16.mxu0 0
        %1281 = vmatpush1.bf16.msra.mxu0 0
        %1282 = vmatprep.subr.bf16.mxu0 0
        %1283 = vmatpush1.bf16.msra.mxu0 0
        %1284 = vmatprep.subr.bf16.mxu0 0
        %1285 = vmatpush1.bf16.msra.mxu0 0
        %1286 = vmatprep.subr.bf16.mxu0 0
        %1287 = vmatpush1.bf16.msra.mxu0 0
        %1288 = vmatprep.subr.bf16.mxu0 0
        %1289 = vmatpush1.bf16.msra.mxu0 0
        %1290 = vmatprep.subr.bf16.mxu0 0
        %1291 = vmatpush1.bf16.msra.mxu0 0
        %1292 = vmatprep.subr.bf16.mxu0 0
        %1293 = vmatpush1.bf16.msra.mxu0 0
        %1294 = vmatprep.subr.bf16.mxu0 0
        %1295 = vmatpush1.bf16.msra.mxu0 0
        %1296 = vmatprep.subr.bf16.mxu0 0
        %1297 = vmatpush1.bf16.msra.mxu0 0
        %1298 = vmatprep.subr.bf16.mxu0 0
        %1299 = vmatpush1.bf16.msra.mxu0 0
        %1300 = vmatprep.subr.bf16.mxu0 0
        %1301 = vmatpush1.bf16.msra.mxu0 0
        %1302 = vmatprep.subr.bf16.mxu0 0
        %1303 = vmatpush1.bf16.msra.mxu0 0
        %1304 = vmatprep.mubr.bf16.mxu0 0
        %1305 = vmatmul.mubr.bf16.gmra.mrb[0].mxu0 %v1270
        %v1306 = vpop.f32.mrb[0].mxu0
        %v1307 = vadd.f32 %v1254, %v1306
        %v1308 = vpop.f32.mrb[0].mxu0
        %v1309 = vpop.f32.mrb[0].mxu0
        %v1310 = vpop.f32.mrb[0].mxu0
        %1311 = vdwg.mxu0
        %v1312 = vmul.f32 %v1307, 0.35355338
        %1314 = vrot.lane.b32.xlu0 %v1312, 120
        %v1315 = vpop.permute.xlu0 %1314
        %1317 = vrot.lane.b32.xlu0 %v1312, 112
        %v1318 = vpop.permute.xlu0 %1317
        %1320 = vrot.lane.b32.xlu0 %v1312, 104
        %v1321 = vpop.permute.xlu0 %1320
        %v1323 = vcombine.low %v1312, %v1318
        %v1324 = vcombine.high %v1312, %v1318
        %v1326 = vunpack.c.l.s4 1983009808
        %v1327 = vunpack.c.0.s8 %v1326
        %v1328 = vlaneseq
        %v1329 = vshrl.u32 %v1328, 7
        %v1330 = vsub.s32 %v1327, %v1329
        %v1331 = vrot.slane %v1323, %v1330
        %v1333 = vunpack.c.l.s4 1983009808
        %v1334 = vunpack.c.0.s8 %v1333
        %v1335 = vlaneseq
        %v1336 = vshrl.u32 %v1335, 7
        %v1337 = vsub.s32 %v1334, %v1336
        %v1338 = vrot.slane %v1324, %v1337
        %v1339 = vcombine.low %v1315, %v1321
        %v1340 = vcombine.high %v1315, %v1321
        %v1342 = vunpack.c.l.s4 1983009808
        %v1343 = vunpack.c.0.s8 %v1342
        %v1344 = vlaneseq
        %v1345 = vshrl.u32 %v1344, 7
        %v1346 = vsub.s32 %v1343, %v1345
        %v1347 = vrot.slane %v1339, %v1346
        %v1349 = vunpack.c.l.s4 1983009808
        %v1350 = vunpack.c.0.s8 %v1349
        %v1351 = vlaneseq
        %v1352 = vshrl.u32 %v1351, 7
        %v1353 = vsub.s32 %v1350, %v1352
        %v1354 = vrot.slane %v1340, %v1353
        %v1355 = vcombine.low %v1331, %v1347
        %v1356 = vcombine.high %v1331, %v1347
        %v1358 = vunpack.c.l.s4 1934713408
        %v1359 = vunpack.c.0.s8 %v1358
        %v1360 = vlaneseq
        %v1361 = vshrl.u32 %v1360, 7
        %v1362 = vsub.s32 %v1359, %v1361
        %v1363 = vrot.slane %v1355, %v1362
        %v1365 = vunpack.c.l.s4 1934713408
        %v1366 = vunpack.c.0.s8 %v1365
        %v1367 = vlaneseq
        %v1368 = vshrl.u32 %v1367, 7
        %v1369 = vsub.s32 %v1366, %v1368
        %v1370 = vrot.slane %v1356, %v1369
        %v1371 = vcombine.low %v1338, %v1354
        %v1372 = vcombine.high %v1338, %v1354
        %v1374 = vunpack.c.l.s4 1934713408
        %v1375 = vunpack.c.0.s8 %v1374
        %v1376 = vlaneseq
        %v1377 = vshrl.u32 %v1376, 7
        %v1378 = vsub.s32 %v1375, %v1377
        %v1379 = vrot.slane %v1371, %v1378
        %v1381 = vunpack.c.l.s4 1934713408
        %v1382 = vunpack.c.0.s8 %v1381
        %v1383 = vlaneseq
        %v1384 = vshrl.u32 %v1383, 7
        %v1385 = vsub.s32 %v1382, %v1384
        %v1386 = vrot.slane %v1372, %v1385
        %v1387 = vcombine.high %v1363, 0.0
        %v1388 = vcombine.high %v1370, 0.0
        %v1389 = vcombine.high %v1379, 0.0
        %v1390 = vcombine.high %v1386, 0.0
        %v1391 = vcombine.low %v1363, %v1370
        %v1393 = vunpack.c.l.s4 1983009808
        %v1394 = vunpack.c.0.s8 %v1393
        %v1395 = vlaneseq
        %v1396 = vshrl.u32 %v1395, 7
        %v1397 = vsub.s32 %v1394, %v1396
        %v1398 = vrot.slane %v1391, %v1397
        %v1399 = vcombine.low %v1387, %v1388
        %v1401 = vunpack.c.l.s4 1983009808
        %v1402 = vunpack.c.0.s8 %v1401
        %v1403 = vlaneseq
        %v1404 = vshrl.u32 %v1403, 7
        %v1405 = vsub.s32 %v1402, %v1404
        %v1406 = vrot.slane %v1399, %v1405
        %v1407 = vcombine.low %v1379, %v1386
        %v1409 = vunpack.c.l.s4 1983009808
        %v1410 = vunpack.c.0.s8 %v1409
        %v1411 = vlaneseq
        %v1412 = vshrl.u32 %v1411, 7
        %v1413 = vsub.s32 %v1410, %v1412
        %v1414 = vrot.slane %v1407, %v1413
        %v1415 = vcombine.low %v1389, %v1390
        %v1417 = vunpack.c.l.s4 1983009808
        %v1418 = vunpack.c.0.s8 %v1417
        %v1419 = vlaneseq
        %v1420 = vshrl.u32 %v1419, 7
        %v1421 = vsub.s32 %v1418, %v1420
        %v1422 = vrot.slane %v1415, %v1421
        %v1423 = vcombine.low %v1398, %v1406
        %v1424 = vcombine.high %v1398, %v1406
        %v1426 = vunpack.c.l.s4 1934713408
        %v1427 = vunpack.c.0.s8 %v1426
        %v1428 = vlaneseq
        %v1429 = vshrl.u32 %v1428, 7
        %v1430 = vsub.s32 %v1427, %v1429
        %v1431 = vrot.slane %v1423, %v1430
        %v1433 = vunpack.c.l.s4 1934713408
        %v1434 = vunpack.c.0.s8 %v1433
        %v1435 = vlaneseq
        %v1436 = vshrl.u32 %v1435, 7
        %v1437 = vsub.s32 %v1434, %v1436
        %v1438 = vrot.slane %v1424, %v1437
        %v1439 = vcombine.low %v1414, %v1422
        %v1440 = vcombine.high %v1414, %v1422
        %v1442 = vunpack.c.l.s4 1934713408
        %v1443 = vunpack.c.0.s8 %v1442
        %v1444 = vlaneseq
        %v1445 = vshrl.u32 %v1444, 7
        %v1446 = vsub.s32 %v1443, %v1445
        %v1447 = vrot.slane %v1439, %v1446
        %v1449 = vunpack.c.l.s4 1934713408
        %v1450 = vunpack.c.0.s8 %v1449
        %v1451 = vlaneseq
        %v1452 = vshrl.u32 %v1451, 7
        %v1453 = vsub.s32 %v1450, %v1452
        %v1454 = vrot.slane %v1440, %v1453
        %v1455 = vcombine.low %v1431, %v1447
        %v1456 = vcombine.high %v1431, %v1447
        %v1457 = vcombine.low %v1438, %v1454
        %v1458 = vcombine.high %v1438, %v1454
        %v1459 = vpack.c.bf16 %v1455, %v1455
        %v1460 = vpack.c.bf16 %v1456, %v1456
        %v1461 = vpack.c.bf16 %v1457, %v1457
        %v1462 = vpack.c.bf16 %v1458, %v1458
        %v1463 = vld [vmem:[#allocation2] sm:$0xf]
        %v1464 = vld [vmem:[#allocation2 + $0x4] sm:$0xf]
        %v1465 = vld [vmem:[#allocation2 + $0x8] sm:$0xf]
        %v1466 = vld [vmem:[#allocation2 + $0xc] sm:$0xf]
        %v1467 = vld [vmem:[#allocation3] sm:$0xf]
        %v1468 = vld [vmem:[#allocation3 + $0x4] sm:$0xf]
        %v1469 = vld [vmem:[#allocation3 + $0x8] sm:$0xf]
        %v1470 = vld [vmem:[#allocation3 + $0xc] sm:$0xf]
        %vm1471 = vcmask 64512
        %v1473 = vsel %vm1471, %v1459, 0
        %v1476 = vsel %vm1471, %v1463, 0
        %1478 = vmatprep.subr.bf16.mxu0 0
        %1479 = vmatpush1.bf16.xpose.msra.mxu0 %v1476
        %1480 = vmatprep.subr.bf16.mxu0 0
        %1481 = vmatpush1.bf16.xpose.msra.mxu0 0
        %1482 = vmatprep.subr.bf16.mxu0 0
        %1483 = vmatpush1.bf16.xpose.msra.mxu0 0
        %1484 = vmatprep.subr.bf16.mxu0 0
        %1485 = vmatpush1.bf16.xpose.msra.mxu0 0
        %1486 = vmatprep.subr.bf16.mxu0 0
        %1487 = vmatpush1.bf16.xpose.msra.mxu0 0
        %1488 = vmatprep.subr.bf16.mxu0 0
        %1489 = vmatpush1.bf16.xpose.msra.mxu0 0
        %1490 = vmatprep.subr.bf16.mxu0 0
        %1491 = vmatpush1.bf16.xpose.msra.mxu0 0
        %1492 = vmatprep.subr.bf16.mxu0 0
        %1493 = vmatpush1.bf16.xpose.msra.mxu0 0
        %1494 = vmatprep.subr.bf16.mxu0 0
        %1495 = vmatpush1.bf16.xpose.msra.mxu0 0
        %1496 = vmatprep.subr.bf16.mxu0 0
        %1497 = vmatpush1.bf16.xpose.msra.mxu0 0
        %1498 = vmatprep.subr.bf16.mxu0 0
        %1499 = vmatpush1.bf16.xpose.msra.mxu0 0
        %1500 = vmatprep.subr.bf16.mxu0 0
        %1501 = vmatpush1.bf16.xpose.msra.mxu0 0
        %1502 = vmatprep.subr.bf16.mxu0 0
        %1503 = vmatpush1.bf16.xpose.msra.mxu0 0
        %1504 = vmatprep.subr.bf16.mxu0 0
        %1505 = vmatpush1.bf16.xpose.msra.mxu0 0
        %1506 = vmatprep.subr.bf16.mxu0 0
        %1507 = vmatpush1.bf16.xpose.msra.mxu0 0
        %1508 = vmatprep.subr.bf16.mxu0 0
        %1509 = vmatpush1.bf16.xpose.msra.mxu0 0
        %1510 = vmatprep.mubr.bf16.mxu0 0
        %1511 = vmatmul.mubr.bf16.gmra.mrb[0].mxu0 %v1473
        %v1512 = vpop.f32.mrb[0].mxu0
        %v1513 = vadd.f32 0.0, %v1512
        %v1514 = vpop.f32.mrb[0].mxu0
        %v1515 = vpop.f32.mrb[0].mxu0
        %v1516 = vpop.f32.mrb[0].mxu0
        %1517 = vdwg.mxu0
        %v1519 = vsel %vm1471, %v1460, 0
        %v1522 = vsel %vm1471, %v1464, 0
        %1524 = vmatprep.subr.bf16.mxu0 0
        %1525 = vmatpush1.bf16.xpose.msra.mxu0 %v1522
        %1526 = vmatprep.subr.bf16.mxu0 0
        %1527 = vmatpush1.bf16.xpose.msra.mxu0 0
        %1528 = vmatprep.subr.bf16.mxu0 0
        %1529 = vmatpush1.bf16.xpose.msra.mxu0 0
        %1530 = vmatprep.subr.bf16.mxu0 0
        %1531 = vmatpush1.bf16.xpose.msra.mxu0 0
        %1532 = vmatprep.subr.bf16.mxu0 0
        %1533 = vmatpush1.bf16.xpose.msra.mxu0 0
        %1534 = vmatprep.subr.bf16.mxu0 0
        %1535 = vmatpush1.bf16.xpose.msra.mxu0 0
        %1536 = vmatprep.subr.bf16.mxu0 0
        %1537 = vmatpush1.bf16.xpose.msra.mxu0 0
        %1538 = vmatprep.subr.bf16.mxu0 0
        %1539 = vmatpush1.bf16.xpose.msra.mxu0 0
        %1540 = vmatprep.subr.bf16.mxu0 0
        %1541 = vmatpush1.bf16.xpose.msra.mxu0 0
        %1542 = vmatprep.subr.bf16.mxu0 0
        %1543 = vmatpush1.bf16.xpose.msra.mxu0 0
        %1544 = vmatprep.subr.bf16.mxu0 0
        %1545 = vmatpush1.bf16.xpose.msra.mxu0 0
        %1546 = vmatprep.subr.bf16.mxu0 0
        %1547 = vmatpush1.bf16.xpose.msra.mxu0 0
        %1548 = vmatprep.subr.bf16.mxu0 0
        %1549 = vmatpush1.bf16.xpose.msra.mxu0 0
        %1550 = vmatprep.subr.bf16.mxu0 0
        %1551 = vmatpush1.bf16.xpose.msra.mxu0 0
        %1552 = vmatprep.subr.bf16.mxu0 0
        %1553 = vmatpush1.bf16.xpose.msra.mxu0 0
        %1554 = vmatprep.subr.bf16.mxu0 0
        %1555 = vmatpush1.bf16.xpose.msra.mxu0 0
        %1556 = vmatprep.mubr.bf16.mxu0 0
        %1557 = vmatmul.mubr.bf16.gmra.mrb[0].mxu0 %v1519
        %v1558 = vpop.f32.mrb[0].mxu0
        %v1559 = vadd.f32 0.0, %v1558
        %v1560 = vpop.f32.mrb[0].mxu0
        %v1561 = vpop.f32.mrb[0].mxu0
        %v1562 = vpop.f32.mrb[0].mxu0
        %1563 = vdwg.mxu0
        %v1565 = vsel %vm1471, %v1461, 0
        %v1568 = vsel %vm1471, %v1465, 0
        %1570 = vmatprep.subr.bf16.mxu0 0
        %1571 = vmatpush1.bf16.xpose.msra.mxu0 %v1568
        %1572 = vmatprep.subr.bf16.mxu0 0
        %1573 = vmatpush1.bf16.xpose.msra.mxu0 0
        %1574 = vmatprep.subr.bf16.mxu0 0
        %1575 = vmatpush1.bf16.xpose.msra.mxu0 0
        %1576 = vmatprep.subr.bf16.mxu0 0
        %1577 = vmatpush1.bf16.xpose.msra.mxu0 0
        %1578 = vmatprep.subr.bf16.mxu0 0
        %1579 = vmatpush1.bf16.xpose.msra.mxu0 0
        %1580 = vmatprep.subr.bf16.mxu0 0
        %1581 = vmatpush1.bf16.xpose.msra.mxu0 0
        %1582 = vmatprep.subr.bf16.mxu0 0
        %1583 = vmatpush1.bf16.xpose.msra.mxu0 0
        %1584 = vmatprep.subr.bf16.mxu0 0
        %1585 = vmatpush1.bf16.xpose.msra.mxu0 0
        %1586 = vmatprep.subr.bf16.mxu0 0
        %1587 = vmatpush1.bf16.xpose.msra.mxu0 0
        %1588 = vmatprep.subr.bf16.mxu0 0
        %1589 = vmatpush1.bf16.xpose.msra.mxu0 0
        %1590 = vmatprep.subr.bf16.mxu0 0
        %1591 = vmatpush1.bf16.xpose.msra.mxu0 0
        %1592 = vmatprep.subr.bf16.mxu0 0
        %1593 = vmatpush1.bf16.xpose.msra.mxu0 0
        %1594 = vmatprep.subr.bf16.mxu0 0
        %1595 = vmatpush1.bf16.xpose.msra.mxu0 0
        %1596 = vmatprep.subr.bf16.mxu0 0
        %1597 = vmatpush1.bf16.xpose.msra.mxu0 0
        %1598 = vmatprep.subr.bf16.mxu0 0
        %1599 = vmatpush1.bf16.xpose.msra.mxu0 0
        %1600 = vmatprep.subr.bf16.mxu0 0
        %1601 = vmatpush1.bf16.xpose.msra.mxu0 0
        %1602 = vmatprep.mubr.bf16.mxu0 0
        %1603 = vmatmul.mubr.bf16.gmra.mrb[0].mxu0 %v1565
        %v1604 = vpop.f32.mrb[0].mxu0
        %v1605 = vadd.f32 0.0, %v1604
        %v1606 = vpop.f32.mrb[0].mxu0
        %v1607 = vpop.f32.mrb[0].mxu0
        %v1608 = vpop.f32.mrb[0].mxu0
        %1609 = vdwg.mxu0
        %v1611 = vsel %vm1471, %v1462, 0
        %v1614 = vsel %vm1471, %v1466, 0
        %1616 = vmatprep.subr.bf16.mxu0 0
        %1617 = vmatpush1.bf16.xpose.msra.mxu0 %v1614
        %1618 = vmatprep.subr.bf16.mxu0 0
        %1619 = vmatpush1.bf16.xpose.msra.mxu0 0
        %1620 = vmatprep.subr.bf16.mxu0 0
        %1621 = vmatpush1.bf16.xpose.msra.mxu0 0
        %1622 = vmatprep.subr.bf16.mxu0 0
        %1623 = vmatpush1.bf16.xpose.msra.mxu0 0
        %1624 = vmatprep.subr.bf16.mxu0 0
        %1625 = vmatpush1.bf16.xpose.msra.mxu0 0
        %1626 = vmatprep.subr.bf16.mxu0 0
        %1627 = vmatpush1.bf16.xpose.msra.mxu0 0
        %1628 = vmatprep.subr.bf16.mxu0 0
        %1629 = vmatpush1.bf16.xpose.msra.mxu0 0
        %1630 = vmatprep.subr.bf16.mxu0 0
        %1631 = vmatpush1.bf16.xpose.msra.mxu0 0
        %1632 = vmatprep.subr.bf16.mxu0 0
        %1633 = vmatpush1.bf16.xpose.msra.mxu0 0
        %1634 = vmatprep.subr.bf16.mxu0 0
        %1635 = vmatpush1.bf16.xpose.msra.mxu0 0
        %1636 = vmatprep.subr.bf16.mxu0 0
        %1637 = vmatpush1.bf16.xpose.msra.mxu0 0
        %1638 = vmatprep.subr.bf16.mxu0 0
        %1639 = vmatpush1.bf16.xpose.msra.mxu0 0
        %1640 = vmatprep.subr.bf16.mxu0 0
        %1641 = vmatpush1.bf16.xpose.msra.mxu0 0
        %1642 = vmatprep.subr.bf16.mxu0 0
        %1643 = vmatpush1.bf16.xpose.msra.mxu0 0
        %1644 = vmatprep.subr.bf16.mxu0 0
        %1645 = vmatpush1.bf16.xpose.msra.mxu0 0
        %1646 = vmatprep.subr.bf16.mxu0 0
        %1647 = vmatpush1.bf16.xpose.msra.mxu0 0
        %1648 = vmatprep.mubr.bf16.mxu0 0
        %1649 = vmatmul.mubr.bf16.gmra.mrb[0].mxu0 %v1611
        %v1650 = vpop.f32.mrb[0].mxu0
        %v1651 = vadd.f32 0.0, %v1650
        %v1652 = vpop.f32.mrb[0].mxu0
        %v1653 = vpop.f32.mrb[0].mxu0
        %v1654 = vpop.f32.mrb[0].mxu0
        %1655 = vdwg.mxu0
        %v1656 = vsel %vm1471, %v1513, -inf
        %1657 = vmax.xlane.f32.xlu0 %v1656
        %v1658 = vpop.xlane.xlu0 %1657
        %v1659 = vsel %vm1471, %v1559, -inf
        %1660 = vmax.xlane.f32.xlu0 %v1659
        %v1661 = vpop.xlane.xlu0 %1660
        %v1662 = vsel %vm1471, %v1605, -inf
        %1663 = vmax.xlane.f32.xlu0 %v1662
        %v1664 = vpop.xlane.xlu0 %1663
        %v1665 = vsel %vm1471, %v1651, -inf
        %1666 = vmax.xlane.f32.xlu0 %v1665
        %v1667 = vpop.xlane.xlu0 %1666
        %v1668 = vsub.f32 %v1513, %v1658
        %v1669 = vsub.f32 %v1559, %v1661
        %v1670 = vsub.f32 %v1605, %v1664
        %v1671 = vsub.f32 %v1651, %v1667
        %v1672 = vmul.f32 %v1668, 1.442695
        %v1673 = vpow.pop %v1672
        %v1674 = vmul.f32 %v1669, 1.442695
        %v1675 = vpow.pop %v1674
        %v1676 = vmul.f32 %v1670, 1.442695
        %v1677 = vpow.pop %v1676
        %v1678 = vmul.f32 %v1671, 1.442695
        %v1679 = vpow.pop %v1678
        %v1680 = vsel %vm1471, %v1673, 0.0
        %1681 = vadd.xlane.f32.xlu0 %v1680
        %v1682 = vpop.xlane.xlu0 %1681
        %v1683 = vsel %vm1471, %v1675, 0.0
        %1684 = vadd.xlane.f32.xlu0 %v1683
        %v1685 = vpop.xlane.xlu0 %1684
        %v1686 = vsel %vm1471, %v1677, 0.0
        %1687 = vadd.xlane.f32.xlu0 %v1686
        %v1688 = vpop.xlane.xlu0 %1687
        %v1689 = vsel %vm1471, %v1679, 0.0
        %1690 = vadd.xlane.f32.xlu0 %v1689
        %v1691 = vpop.xlane.xlu0 %1690
        %v1692 = vrcp.pop %v1682
        %v1693 = vrcp.pop %v1685
        %v1694 = vrcp.pop %v1688
        %v1695 = vrcp.pop %v1691
        %v1696 = vmul.f32 %v1673, %v1692
        %v1697 = vmul.f32 %v1675, %v1693
        %v1698 = vmul.f32 %v1677, %v1694
        %v1699 = vmul.f32 %v1679, %v1695
        %v1700 = vpack.c.bf16 %v1696, %v1696
        %v1701 = vpack.c.bf16 %v1697, %v1697
        %v1702 = vpack.c.bf16 %v1698, %v1698
        %v1703 = vpack.c.bf16 %v1699, %v1699
        %v1705 = vsel %vm1471, %v1700, 0
        %vm1707 = vcmask 1043456
        %v1709 = vsel %vm1707, %v1467, 0
        %1711 = vmatprep.subr.bf16.mxu0 0
        %1712 = vmatpush1.bf16.msra.mxu0 %v1709
        %1713 = vmatprep.subr.bf16.mxu0 0
        %1714 = vmatpush1.bf16.msra.mxu0 0
        %1715 = vmatprep.subr.bf16.mxu0 0
        %1716 = vmatpush1.bf16.msra.mxu0 0
        %1717 = vmatprep.subr.bf16.mxu0 0
        %1718 = vmatpush1.bf16.msra.mxu0 0
        %1719 = vmatprep.subr.bf16.mxu0 0
        %1720 = vmatpush1.bf16.msra.mxu0 0
        %1721 = vmatprep.subr.bf16.mxu0 0
        %1722 = vmatpush1.bf16.msra.mxu0 0
        %1723 = vmatprep.subr.bf16.mxu0 0
        %1724 = vmatpush1.bf16.msra.mxu0 0
        %1725 = vmatprep.subr.bf16.mxu0 0
        %1726 = vmatpush1.bf16.msra.mxu0 0
        %1727 = vmatprep.subr.bf16.mxu0 0
        %1728 = vmatpush1.bf16.msra.mxu0 0
        %1729 = vmatprep.subr.bf16.mxu0 0
        %1730 = vmatpush1.bf16.msra.mxu0 0
        %1731 = vmatprep.subr.bf16.mxu0 0
        %1732 = vmatpush1.bf16.msra.mxu0 0
        %1733 = vmatprep.subr.bf16.mxu0 0
        %1734 = vmatpush1.bf16.msra.mxu0 0
        %1735 = vmatprep.subr.bf16.mxu0 0
        %1736 = vmatpush1.bf16.msra.mxu0 0
        %1737 = vmatprep.subr.bf16.mxu0 0
        %1738 = vmatpush1.bf16.msra.mxu0 0
        %1739 = vmatprep.subr.bf16.mxu0 0
        %1740 = vmatpush1.bf16.msra.mxu0 0
        %1741 = vmatprep.subr.bf16.mxu0 0
        %1742 = vmatpush1.bf16.msra.mxu0 0
        %1743 = vmatprep.mubr.bf16.mxu0 0
        %1744 = vmatmul.mubr.bf16.gmra.mrb[0].mxu0 %v1705
        %v1745 = vpop.f32.mrb[0].mxu0
        %v1746 = vadd.f32 0.0, %v1745
        %v1747 = vpop.f32.mrb[0].mxu0
        %v1748 = vpop.f32.mrb[0].mxu0
        %v1749 = vpop.f32.mrb[0].mxu0
        %1750 = vdwg.mxu0
        %v1752 = vsel %vm1471, %v1701, 0
        %v1755 = vsel %vm1707, %v1468, 0
        %1757 = vmatprep.subr.bf16.mxu0 0
        %1758 = vmatpush1.bf16.msra.mxu0 %v1755
        %1759 = vmatprep.subr.bf16.mxu0 0
        %1760 = vmatpush1.bf16.msra.mxu0 0
        %1761 = vmatprep.subr.bf16.mxu0 0
        %1762 = vmatpush1.bf16.msra.mxu0 0
        %1763 = vmatprep.subr.bf16.mxu0 0
        %1764 = vmatpush1.bf16.msra.mxu0 0
        %1765 = vmatprep.subr.bf16.mxu0 0
        %1766 = vmatpush1.bf16.msra.mxu0 0
        %1767 = vmatprep.subr.bf16.mxu0 0
        %1768 = vmatpush1.bf16.msra.mxu0 0
        %1769 = vmatprep.subr.bf16.mxu0 0
        %1770 = vmatpush1.bf16.msra.mxu0 0
        %1771 = vmatprep.subr.bf16.mxu0 0
        %1772 = vmatpush1.bf16.msra.mxu0 0
        %1773 = vmatprep.subr.bf16.mxu0 0
        %1774 = vmatpush1.bf16.msra.mxu0 0
        %1775 = vmatprep.subr.bf16.mxu0 0
        %1776 = vmatpush1.bf16.msra.mxu0 0
        %1777 = vmatprep.subr.bf16.mxu0 0
        %1778 = vmatpush1.bf16.msra.mxu0 0
        %1779 = vmatprep.subr.bf16.mxu0 0
        %1780 = vmatpush1.bf16.msra.mxu0 0
        %1781 = vmatprep.subr.bf16.mxu0 0
        %1782 = vmatpush1.bf16.msra.mxu0 0
        %1783 = vmatprep.subr.bf16.mxu0 0
        %1784 = vmatpush1.bf16.msra.mxu0 0
        %1785 = vmatprep.subr.bf16.mxu0 0
        %1786 = vmatpush1.bf16.msra.mxu0 0
        %1787 = vmatprep.subr.bf16.mxu0 0
        %1788 = vmatpush1.bf16.msra.mxu0 0
        %1789 = vmatprep.mubr.bf16.mxu0 0
        %1790 = vmatmul.mubr.bf16.gmra.mrb[0].mxu0 %v1752
        %v1791 = vpop.f32.mrb[0].mxu0
        %v1792 = vadd.f32 0.0, %v1791
        %v1793 = vpop.f32.mrb[0].mxu0
        %v1794 = vpop.f32.mrb[0].mxu0
        %v1795 = vpop.f32.mrb[0].mxu0
        %1796 = vdwg.mxu0
        %v1798 = vsel %vm1471, %v1702, 0
        %v1801 = vsel %vm1707, %v1469, 0
        %1803 = vmatprep.subr.bf16.mxu0 0
        %1804 = vmatpush1.bf16.msra.mxu0 %v1801
        %1805 = vmatprep.subr.bf16.mxu0 0
        %1806 = vmatpush1.bf16.msra.mxu0 0
        %1807 = vmatprep.subr.bf16.mxu0 0
        %1808 = vmatpush1.bf16.msra.mxu0 0
        %1809 = vmatprep.subr.bf16.mxu0 0
        %1810 = vmatpush1.bf16.msra.mxu0 0
        %1811 = vmatprep.subr.bf16.mxu0 0
        %1812 = vmatpush1.bf16.msra.mxu0 0
        %1813 = vmatprep.subr.bf16.mxu0 0
        %1814 = vmatpush1.bf16.msra.mxu0 0
        %1815 = vmatprep.subr.bf16.mxu0 0
        %1816 = vmatpush1.bf16.msra.mxu0 0
        %1817 = vmatprep.subr.bf16.mxu0 0
        %1818 = vmatpush1.bf16.msra.mxu0 0
        %1819 = vmatprep.subr.bf16.mxu0 0
        %1820 = vmatpush1.bf16.msra.mxu0 0
        %1821 = vmatprep.subr.bf16.mxu0 0
        %1822 = vmatpush1.bf16.msra.mxu0 0
        %1823 = vmatprep.subr.bf16.mxu0 0
        %1824 = vmatpush1.bf16.msra.mxu0 0
        %1825 = vmatprep.subr.bf16.mxu0 0
        %1826 = vmatpush1.bf16.msra.mxu0 0
        %1827 = vmatprep.subr.bf16.mxu0 0
        %1828 = vmatpush1.bf16.msra.mxu0 0
        %1829 = vmatprep.subr.bf16.mxu0 0
        %1830 = vmatpush1.bf16.msra.mxu0 0
        %1831 = vmatprep.subr.bf16.mxu0 0
        %1832 = vmatpush1.bf16.msra.mxu0 0
        %1833 = vmatprep.subr.bf16.mxu0 0
        %1834 = vmatpush1.bf16.msra.mxu0 0
        %1835 = vmatprep.mubr.bf16.mxu0 0
        %1836 = vmatmul.mubr.bf16.gmra.mrb[0].mxu0 %v1798
        %v1837 = vpop.f32.mrb[0].mxu0
        %v1838 = vadd.f32 0.0, %v1837
        %v1839 = vpop.f32.mrb[0].mxu0
        %v1840 = vpop.f32.mrb[0].mxu0
        %v1841 = vpop.f32.mrb[0].mxu0
        %1842 = vdwg.mxu0
        %v1844 = vsel %vm1471, %v1703, 0
        %v1847 = vsel %vm1707, %v1470, 0
        %1849 = vmatprep.subr.bf16.mxu0 0
        %1850 = vmatpush1.bf16.msra.mxu0 %v1847
        %1851 = vmatprep.subr.bf16.mxu0 0
        %1852 = vmatpush1.bf16.msra.mxu0 0
        %1853 = vmatprep.subr.bf16.mxu0 0
        %1854 = vmatpush1.bf16.msra.mxu0 0
        %1855 = vmatprep.subr.bf16.mxu0 0
        %1856 = vmatpush1.bf16.msra.mxu0 0
        %1857 = vmatprep.subr.bf16.mxu0 0
        %1858 = vmatpush1.bf16.msra.mxu0 0
        %1859 = vmatprep.subr.bf16.mxu0 0
        %1860 = vmatpush1.bf16.msra.mxu0 0
        %1861 = vmatprep.subr.bf16.mxu0 0
        %1862 = vmatpush1.bf16.msra.mxu0 0
        %1863 = vmatprep.subr.bf16.mxu0 0
        %1864 = vmatpush1.bf16.msra.mxu0 0
        %1865 = vmatprep.subr.bf16.mxu0 0
        %1866 = vmatpush1.bf16.msra.mxu0 0
        %1867 = vmatprep.subr.bf16.mxu0 0
        %1868 = vmatpush1.bf16.msra.mxu0 0
        %1869 = vmatprep.subr.bf16.mxu0 0
        %1870 = vmatpush1.bf16.msra.mxu0 0
        %1871 = vmatprep.subr.bf16.mxu0 0
        %1872 = vmatpush1.bf16.msra.mxu0 0
        %1873 = vmatprep.subr.bf16.mxu0 0
        %1874 = vmatpush1.bf16.msra.mxu0 0
        %1875 = vmatprep.subr.bf16.mxu0 0
        %1876 = vmatpush1.bf16.msra.mxu0 0
        %1877 = vmatprep.subr.bf16.mxu0 0
        %1878 = vmatpush1.bf16.msra.mxu0 0
        %1879 = vmatprep.subr.bf16.mxu0 0
        %1880 = vmatpush1.bf16.msra.mxu0 0
        %1881 = vmatprep.mubr.bf16.mxu0 0
        %1882 = vmatmul.mubr.bf16.gmra.mrb[0].mxu0 %v1844
        %v1883 = vpop.f32.mrb[0].mxu0
        %v1884 = vadd.f32 0.0, %v1883
        %v1885 = vpop.f32.mrb[0].mxu0
        %v1886 = vpop.f32.mrb[0].mxu0
        %v1887 = vpop.f32.mrb[0].mxu0
        %1888 = vdwg.mxu0
        %v1889 = vcombine.low %v1746, %v1838
        %v1890 = vcombine.high %v1746, %v1838
        %v1892 = vunpack.c.l.s4 1983009808
        %v1893 = vunpack.c.0.s8 %v1892
        %v1894 = vlaneseq
        %v1895 = vshrl.u32 %v1894, 7
        %v1896 = vsub.s32 %v1893, %v1895
        %v1897 = vrot.slane %v1889, %v1896
        %v1899 = vunpack.c.l.s4 1983009808
        %v1900 = vunpack.c.0.s8 %v1899
        %v1901 = vlaneseq
        %v1902 = vshrl.u32 %v1901, 7
        %v1903 = vsub.s32 %v1900, %v1902
        %v1904 = vrot.slane %v1890, %v1903
        %v1905 = vcombine.low %v1792, %v1884
        %v1906 = vcombine.high %v1792, %v1884
        %v1908 = vunpack.c.l.s4 1983009808
        %v1909 = vunpack.c.0.s8 %v1908
        %v1910 = vlaneseq
        %v1911 = vshrl.u32 %v1910, 7
        %v1912 = vsub.s32 %v1909, %v1911
        %v1913 = vrot.slane %v1905, %v1912
        %v1915 = vunpack.c.l.s4 1983009808
        %v1916 = vunpack.c.0.s8 %v1915
        %v1917 = vlaneseq
        %v1918 = vshrl.u32 %v1917, 7
        %v1919 = vsub.s32 %v1916, %v1918
        %v1920 = vrot.slane %v1906, %v1919
        %v1921 = vcombine.low %v1897, %v1913
        %v1922 = vcombine.high %v1897, %v1913
        %v1924 = vunpack.c.l.s4 1934713408
        %v1925 = vunpack.c.0.s8 %v1924
        %v1926 = vlaneseq
        %v1927 = vshrl.u32 %v1926, 7
        %v1928 = vsub.s32 %v1925, %v1927
        %v1929 = vrot.slane %v1921, %v1928
        %v1931 = vunpack.c.l.s4 1934713408
        %v1932 = vunpack.c.0.s8 %v1931
        %v1933 = vlaneseq
        %v1934 = vshrl.u32 %v1933, 7
        %v1935 = vsub.s32 %v1932, %v1934
        %v1936 = vrot.slane %v1922, %v1935
        %v1937 = vcombine.low %v1904, %v1920
        %v1938 = vcombine.high %v1904, %v1920
        %v1940 = vunpack.c.l.s4 1934713408
        %v1941 = vunpack.c.0.s8 %v1940
        %v1942 = vlaneseq
        %v1943 = vshrl.u32 %v1942, 7
        %v1944 = vsub.s32 %v1941, %v1943
        %v1945 = vrot.slane %v1937, %v1944
        %v1947 = vunpack.c.l.s4 1934713408
        %v1948 = vunpack.c.0.s8 %v1947
        %v1949 = vlaneseq
        %v1950 = vshrl.u32 %v1949, 7
        %v1951 = vsub.s32 %v1948, %v1950
        %v1952 = vrot.slane %v1938, %v1951
        %v1953 = vcombine.high %v1929, 0.0
        %v1954 = vcombine.high %v1936, 0.0
        %v1955 = vcombine.high %v1945, 0.0
        %v1956 = vcombine.high %v1952, 0.0
        %v1957 = vcombine.low %v1929, %v1936
        %v1959 = vunpack.c.l.s4 1983009808
        %v1960 = vunpack.c.0.s8 %v1959
        %v1961 = vlaneseq
        %v1962 = vshrl.u32 %v1961, 7
        %v1963 = vsub.s32 %v1960, %v1962
        %v1964 = vrot.slane %v1957, %v1963
        %v1965 = vcombine.low %v1953, %v1954
        %v1967 = vunpack.c.l.s4 1983009808
        %v1968 = vunpack.c.0.s8 %v1967
        %v1969 = vlaneseq
        %v1970 = vshrl.u32 %v1969, 7
        %v1971 = vsub.s32 %v1968, %v1970
        %v1972 = vrot.slane %v1965, %v1971
        %v1973 = vcombine.low %v1945, %v1952
        %v1975 = vunpack.c.l.s4 1983009808
        %v1976 = vunpack.c.0.s8 %v1975
        %v1977 = vlaneseq
        %v1978 = vshrl.u32 %v1977, 7
        %v1979 = vsub.s32 %v1976, %v1978
        %v1980 = vrot.slane %v1973, %v1979
        %v1981 = vcombine.low %v1955, %v1956
        %v1983 = vunpack.c.l.s4 1983009808
        %v1984 = vunpack.c.0.s8 %v1983
        %v1985 = vlaneseq
        %v1986 = vshrl.u32 %v1985, 7
        %v1987 = vsub.s32 %v1984, %v1986
        %v1988 = vrot.slane %v1981, %v1987
        %v1989 = vcombine.low %v1964, %v1972
        %v1990 = vcombine.high %v1964, %v1972
        %v1992 = vunpack.c.l.s4 1934713408
        %v1993 = vunpack.c.0.s8 %v1992
        %v1994 = vlaneseq
        %v1995 = vshrl.u32 %v1994, 7
        %v1996 = vsub.s32 %v1993, %v1995
        %v1997 = vrot.slane %v1989, %v1996
        %v1999 = vunpack.c.l.s4 1934713408
        %v2000 = vunpack.c.0.s8 %v1999
        %v2001 = vlaneseq
        %v2002 = vshrl.u32 %v2001, 7
        %v2003 = vsub.s32 %v2000, %v2002
        %v2004 = vrot.slane %v1990, %v2003
        %v2005 = vcombine.low %v1980, %v1988
        %v2006 = vcombine.high %v1980, %v1988
        %v2008 = vunpack.c.l.s4 1934713408
        %v2009 = vunpack.c.0.s8 %v2008
        %v2010 = vlaneseq
        %v2011 = vshrl.u32 %v2010, 7
        %v2012 = vsub.s32 %v2009, %v2011
        %v2013 = vrot.slane %v2005, %v2012
        %v2015 = vunpack.c.l.s4 1934713408
        %v2016 = vunpack.c.0.s8 %v2015
        %v2017 = vlaneseq
        %v2018 = vshrl.u32 %v2017, 7
        %v2019 = vsub.s32 %v2016, %v2018
        %v2020 = vrot.slane %v2006, %v2019
        %v2021 = vcombine.low %v1997, %v2013
        %v2022 = vcombine.high %v1997, %v2013
        %v2023 = vcombine.low %v2004, %v2020
        %v2024 = vcombine.high %v2004, %v2020
        %2026 = vrot.lane.b32.xlu0 %v2022, 8
        %v2027 = vpop.permute.xlu0 %2026
        %2030 = vrot.lane.b32.xlu0 %v2023, 16
        %v2031 = vpop.permute.xlu0 %2030
        %2034 = vrot.lane.b32.xlu0 %v2024, 24
        %v2035 = vpop.permute.xlu0 %2034
        %v2037 = vsel %vm1471, %v2021, %v2027
        %vm2038 = vcmask 130048
        %v2039 = vsel %vm2038, %v2037, %v2031
        %vm2040 = vcmask 195584
        %v2041 = vsel %vm2040, %v2039, %v2035
        %v2042 = vpack.c.bf16 %v2041, %v2041
        %v2043 = vld [vmem:[#allocation12] sm:$0xf]
        %v2044 = vld [vmem:[#allocation12 + $0x4] sm:$0xf]
        %v2045 = vld [vmem:[#allocation12 + $0x8] sm:$0xf]
        %v2046 = vld [vmem:[#allocation12 + $0xc] sm:$0xf]
        %v2047 = vld [vmem:[%s11] sm:$0x1]
        %v2049 = vlaneseq
        %v2050 = vshrl.u32 %v2049, 7
        %v2051 = vsub.s32 0, %v2050
        %v2052 = vrot.slane %v2047, %v2051
        %v2058 = vunpack.c.l.b16 %v2043
        %v2059 = vunpack.c.l.b16 %v2044
        %v2060 = vunpack.c.l.b16 %v2045
        %v2061 = vunpack.c.l.b16 %v2046
        %v2062 = vpack.c.b16 %v2059, %v2058
        %v2063 = vpack.c.b16 %v2061, %v2060
        %v2067 = vsel %vm1268, %v2042, 0
        %2069 = vmatprep.subr.bf16.mxu0 0
        %2070 = vmatpush1.bf16.msra.mxu0 %v2062
        %2071 = vmatprep.subr.bf16.mxu0 0
        %2072 = vmatpush1.bf16.msra.mxu0 %v2063
        %2073 = vmatprep.subr.bf16.mxu0 0
        %2074 = vmatpush1.bf16.msra.mxu0 0
        %2075 = vmatprep.subr.bf16.mxu0 0
        %2076 = vmatpush1.bf16.msra.mxu0 0
        %2077 = vmatprep.subr.bf16.mxu0 0
        %2078 = vmatpush1.bf16.msra.mxu0 0
        %2079 = vmatprep.subr.bf16.mxu0 0
        %2080 = vmatpush1.bf16.msra.mxu0 0
        %2081 = vmatprep.subr.bf16.mxu0 0
        %2082 = vmatpush1.bf16.msra.mxu0 0
        %2083 = vmatprep.subr.bf16.mxu0 0
        %2084 = vmatpush1.bf16.msra.mxu0 0
        %2085 = vmatprep.subr.bf16.mxu0 0
        %2086 = vmatpush1.bf16.msra.mxu0 0
        %2087 = vmatprep.subr.bf16.mxu0 0
        %2088 = vmatpush1.bf16.msra.mxu0 0
        %2089 = vmatprep.subr.bf16.mxu0 0
        %2090 = vmatpush1.bf16.msra.mxu0 0
        %2091 = vmatprep.subr.bf16.mxu0 0
        %2092 = vmatpush1.bf16.msra.mxu0 0
        %2093 = vmatprep.subr.bf16.mxu0 0
        %2094 = vmatpush1.bf16.msra.mxu0 0
        %2095 = vmatprep.subr.bf16.mxu0 0
        %2096 = vmatpush1.bf16.msra.mxu0 0
        %2097 = vmatprep.subr.bf16.mxu0 0
        %2098 = vmatpush1.bf16.msra.mxu0 0
        %2099 = vmatprep.subr.bf16.mxu0 0
        %2100 = vmatpush1.bf16.msra.mxu0 0
        %2101 = vmatprep.mubr.bf16.mxu0 0
        %2102 = vmatmul.mubr.bf16.gmra.mrb[0].mxu0 %v2067
        %v2103 = vpop.f32.mrb[0].mxu0
        %v2104 = vadd.f32 %v2052, %v2103
        %v2105 = vpop.f32.mrb[0].mxu0
        %v2106 = vpop.f32.mrb[0].mxu0
        %v2107 = vpop.f32.mrb[0].mxu0
        %2108 = vdwg.mxu0
        %v2109 = vadd.f32 %v1240, %v2104
        %v2110 = vsel %vm1268, %v2109, 0.0
        %2111 = vadd.xlane.f32.xlu0 %v2110
        %v2112 = vpop.xlane.xlu0 %2111
        %v2113 = vrcp.pop 32.0
        %v2114 = vmul.f32 %v2112, %v2113
        %v2115 = vsub.f32 %v2109, %v2114
        %v2116 = vmul.f32 %v2115, %v2115
        %v2117 = vsel %vm1268, %v2116, 0.0
        %2118 = vadd.xlane.f32.xlu0 %v2117
        %v2119 = vpop.xlane.xlu0 %2118
        %v2120 = vmul.f32 %v2119, %v2113
        %v2121 = vadd.f32 %v2120, 1e-05
        %v2122 = vrsqrt.pop %v2121
        %v2123 = vmul.f32 %v2115, %v2122
        %v2124 = vld [vmem:[%s12] sm:$0x1]
        %v2126 = vlaneseq
        %v2127 = vshrl.u32 %v2126, 7
        %v2128 = vsub.s32 0, %v2127
        %v2129 = vrot.slane %v2124, %v2128
        %v2131 = vmul.f32 %v2123, %v2129
        %v2132 = vld [vmem:[%s13] sm:$0x1]
        %v2134 = vlaneseq
        %v2135 = vshrl.u32 %v2134, 7
        %v2136 = vsub.s32 0, %v2135
        %v2137 = vrot.slane %v2132, %v2136
        %v2139 = vadd.f32 %v2131, %v2137
        %v2140 = vpack.c.bf16 %v2139, %v2139
        %v2141 = vld [vmem:[%s14] sm:$0xf]
        %v2142 = vld [vmem:[%s14 + $0x4] sm:$0xf]
        %v2143 = vld [vmem:[%s14 + $0x8] sm:$0xf]
        %v2144 = vld [vmem:[%s14 + $0xc] sm:$0xf]
        %v2145 = vld [vmem:[%s15] sm:$0x1]
        %v2147 = vlaneseq
        %v2148 = vshrl.u32 %v2147, 7
        %v2149 = vsub.s32 0, %v2148
        %v2150 = vrot.slane %v2145, %v2149
        %v2156 = vunpack.c.l.b16 %v2141
        %v2157 = vunpack.c.l.b16 %v2142
        %v2158 = vunpack.c.l.b16 %v2143
        %v2159 = vunpack.c.l.b16 %v2144
        %v2160 = vpack.c.b16 %v2157, %v2156
        %v2161 = vpack.c.b16 %v2159, %v2158
        %v2165 = vsel %vm1268, %v2140, 0
        %2167 = vmatprep.subr.bf16.mxu0 0
        %2168 = vmatpush1.bf16.msra.mxu0 %v2160
        %2169 = vmatprep.subr.bf16.mxu0 0
        %2170 = vmatpush1.bf16.msra.mxu0 %v2161
        %2171 = vmatprep.subr.bf16.mxu0 0
        %2172 = vmatpush1.bf16.msra.mxu0 0
        %2173 = vmatprep.subr.bf16.mxu0 0
        %2174 = vmatpush1.bf16.msra.mxu0 0
        %2175 = vmatprep.subr.bf16.mxu0 0
        %2176 = vmatpush1.bf16.msra.mxu0 0
        %2177 = vmatprep.subr.bf16.mxu0 0
        %2178 = vmatpush1.bf16.msra.mxu0 0
        %2179 = vmatprep.subr.bf16.mxu0 0
        %2180 = vmatpush1.bf16.msra.mxu0 0
        %2181 = vmatprep.subr.bf16.mxu0 0
        %2182 = vmatpush1.bf16.msra.mxu0 0
        %2183 = vmatprep.subr.bf16.mxu0 0
        %2184 = vmatpush1.bf16.msra.mxu0 0
        %2185 = vmatprep.subr.bf16.mxu0 0
        %2186 = vmatpush1.bf16.msra.mxu0 0
        %2187 = vmatprep.subr.bf16.mxu0 0
        %2188 = vmatpush1.bf16.msra.mxu0 0
        %2189 = vmatprep.subr.bf16.mxu0 0
        %2190 = vmatpush1.bf16.msra.mxu0 0
        %2191 = vmatprep.subr.bf16.mxu0 0
        %2192 = vmatpush1.bf16.msra.mxu0 0
        %2193 = vmatprep.subr.bf16.mxu0 0
        %2194 = vmatpush1.bf16.msra.mxu0 0
        %2195 = vmatprep.subr.bf16.mxu0 0
        %2196 = vmatpush1.bf16.msra.mxu0 0
        %2197 = vmatprep.subr.bf16.mxu0 0
        %2198 = vmatpush1.bf16.msra.mxu0 0
        %2199 = vmatprep.mubr.bf16.mxu0 0
        %2200 = vmatmul.mubr.bf16.gmra.mrb[0].mxu0 %v2165
        %v2201 = vpop.f32.mrb[0].mxu0
        %v2202 = vadd.f32 %v2150, %v2201
        %v2203 = vpop.f32.mrb[0].mxu0
        %v2204 = vpop.f32.mrb[0].mxu0
        %v2205 = vpop.f32.mrb[0].mxu0
        %2206 = vdwg.mxu0
        %v2207 = vmax.f32 %v2202, 0.0
        %v2208 = vpack.c.bf16 %v2207, %v2207
        %v2209 = vld [vmem:[%s16] sm:$0xf]
        %v2210 = vld [vmem:[%s16 + $0x4] sm:$0xf]
        %v2211 = vld [vmem:[%s16 + $0x8] sm:$0xf]
        %v2212 = vld [vmem:[%s16 + $0xc] sm:$0xf]
        %v2213 = vld [vmem:[%s16 + $0x10] sm:$0xf]
        %v2214 = vld [vmem:[%s16 + $0x14] sm:$0xf]
        %v2215 = vld [vmem:[%s16 + $0x18] sm:$0xf]
        %v2216 = vld [vmem:[%s16 + $0x1c] sm:$0xf]
        %v2217 = vld [vmem:[%s17] sm:$0x1]
        %v2219 = vlaneseq
        %v2220 = vshrl.u32 %v2219, 7
        %v2221 = vsub.s32 0, %v2220
        %v2222 = vrot.slane %v2217, %v2221
        %v2232 = vunpack.c.l.b16 %v2209
        %v2233 = vunpack.c.l.b16 %v2210
        %v2234 = vunpack.c.l.b16 %v2211
        %v2235 = vunpack.c.l.b16 %v2212
        %v2236 = vunpack.c.l.b16 %v2213
        %v2237 = vunpack.c.l.b16 %v2214
        %v2238 = vunpack.c.l.b16 %v2215
        %v2239 = vunpack.c.l.b16 %v2216
        %v2240 = vpack.c.b16 %v2233, %v2232
        %v2241 = vpack.c.b16 %v2235, %v2234
        %v2242 = vpack.c.b16 %v2237, %v2236
        %v2243 = vpack.c.b16 %v2239, %v2238
        %vm2248 = vcmask 523264
        %v2250 = vsel %vm2248, %v2208, 0
        %2252 = vmatprep.subr.bf16.mxu0 0
        %2253 = vmatpush1.bf16.msra.mxu0 %v2240
        %2254 = vmatprep.subr.bf16.mxu0 0
        %2255 = vmatpush1.bf16.msra.mxu0 %v2241
        %2256 = vmatprep.subr.bf16.mxu0 0
        %2257 = vmatpush1.bf16.msra.mxu0 %v2242
        %2258 = vmatprep.subr.bf16.mxu0 0
        %2259 = vmatpush1.bf16.msra.mxu0 %v2243
        %2260 = vmatprep.subr.bf16.mxu0 0
        %2261 = vmatpush1.bf16.msra.mxu0 0
        %2262 = vmatprep.subr.bf16.mxu0 0
        %2263 = vmatpush1.bf16.msra.mxu0 0
        %2264 = vmatprep.subr.bf16.mxu0 0
        %2265 = vmatpush1.bf16.msra.mxu0 0
        %2266 = vmatprep.subr.bf16.mxu0 0
        %2267 = vmatpush1.bf16.msra.mxu0 0
        %2268 = vmatprep.subr.bf16.mxu0 0
        %2269 = vmatpush1.bf16.msra.mxu0 0
        %2270 = vmatprep.subr.bf16.mxu0 0
        %2271 = vmatpush1.bf16.msra.mxu0 0
        %2272 = vmatprep.subr.bf16.mxu0 0
        %2273 = vmatpush1.bf16.msra.mxu0 0
        %2274 = vmatprep.subr.bf16.mxu0 0
        %2275 = vmatpush1.bf16.msra.mxu0 0
        %2276 = vmatprep.subr.bf16.mxu0 0
        %2277 = vmatpush1.bf16.msra.mxu0 0
        %2278 = vmatprep.subr.bf16.mxu0 0
        %2279 = vmatpush1.bf16.msra.mxu0 0
        %2280 = vmatprep.subr.bf16.mxu0 0
        %2281 = vmatpush1.bf16.msra.mxu0 0
        %2282 = vmatprep.subr.bf16.mxu0 0
        %2283 = vmatpush1.bf16.msra.mxu0 0
        %2284 = vmatprep.mubr.bf16.mxu0 0
        %2285 = vmatmul.mubr.bf16.gmra.mrb[0].mxu0 %v2250
        %v2286 = vpop.f32.mrb[0].mxu0
        %v2287 = vadd.f32 %v2222, %v2286
        %v2288 = vpop.f32.mrb[0].mxu0
        %v2289 = vpop.f32.mrb[0].mxu0
        %v2290 = vpop.f32.mrb[0].mxu0
        %2291 = vdwg.mxu0
        %v2292 = vadd.f32 %v2139, %v2287
        %v2293 = vsel %vm1268, %v2292, 0.0
        %2294 = vadd.xlane.f32.xlu0 %v2293
        %v2295 = vpop.xlane.xlu0 %2294
        %v2296 = vmul.f32 %v2295, %v2113
        %v2297 = vsub.f32 %v2292, %v2296
        %v2298 = vmul.f32 %v2297, %v2297
        %v2299 = vsel %vm1268, %v2298, 0.0
        %2300 = vadd.xlane.f32.xlu0 %v2299
        %v2301 = vpop.xlane.xlu0 %2300
        %v2302 = vmul.f32 %v2301, %v2113
        %v2303 = vadd.f32 %v2302, 1e-05
        %v2304 = vrsqrt.pop %v2303
        %v2305 = vmul.f32 %v2297, %v2304
        %v2306 = vld [vmem:[%s18] sm:$0x1]
        %v2308 = vlaneseq
        %v2309 = vshrl.u32 %v2308, 7
        %v2310 = vsub.s32 0, %v2309
        %v2311 = vrot.slane %v2306, %v2310
        %v2313 = vmul.f32 %v2305, %v2311
        %v2314 = vld [vmem:[%s19] sm:$0x1]
        %v2316 = vlaneseq
        %v2317 = vshrl.u32 %v2316, 7
        %v2318 = vsub.s32 0, %v2317
        %v2319 = vrot.slane %v2314, %v2318
        %v2321 = vadd.f32 %v2313, %v2319
        %2322 = vst.msk [vmem:[%s782] sm:$0xff] %vm1268, %v2321
        %s2323 = sand.u32 %s507, 1
        %s2324 = scalar_lea.sflag [#allocation6], %s2323
        %s2325 = sand.u32 %s507, 1
        %s2326 = smul.addr %s2325, 8
        %s2327 = scalar_lea.vmem [#allocation13], %s2326
        // Predicated region
        $region125: #{tpu_custom_call.1} parent=99 // pred_check
          %p2328 = pneg %p517
        $region126: #{tpu_custom_call.1} parent=99 // pred_check_branch
          %2330 = sbr.rel (%p2328) target = $region128
        $region127: #{tpu_custom_call.1} parent=99 // pred_region
          %s2332 = ssub.s32 128, 128
          %2333 = vsyncadd %s2324, %s2332
          %s2334 = sadd.s32 %s46, %s45
          %s2335 = smul.addr %s2334, 128
          %s2336 = scalar_lea.hbm %s20, %s2335
          %s2338 = sshll.u32 %s2327, 4
          %s2339 = int_to_ptr.vmem [resolvable:$true] %s2338
          %2341 = dma.vmem_to_hbm [thread:$0]  %s2339, 128, %s2336, %s2324
        $region128: #{tpu_custom_call.1} parent=99 // pred_fallthru
          _
      $region100: #{tpu_custom_call.1} parent=5 // pred_fallthru
        _
      %p2342 = scmp.le.s32.totalorder 2, %s36
      // Predicated region
      $region129: #{tpu_custom_call.1} parent=5 // pred_check
        %p2343 = pneg %p2342
      $region130: #{tpu_custom_call.1} parent=5 // pred_check_branch
        %2345 = sbr.rel (%p2343) target = $region132
      $region131: #{tpu_custom_call.1} parent=5 // pred_region
        %s2346 = ssub.s32 %s36, 2
        // Predicated region
        $region133: #{tpu_custom_call.1} parent=131 // pred_check
          %p2347 = pneg %p523
        $region134: #{tpu_custom_call.1} parent=131 // pred_check_branch
          %2349 = sbr.rel (%p2347) target = $region136
        $region135: #{tpu_custom_call.1} parent=131 // pred_region
          %s2350 = sand.u32 %s508, 1
          %s2351 = scalar_lea.sflag [#allocation6], %s2350
          %s2352 = sand.u32 %s508, 1
          %s2353 = smul.addr %s2352, 8
          %s2354 = scalar_lea.vmem [#allocation13], %s2353
          %2355 = dma.done %s2351, 128
        $region136: #{tpu_custom_call.1} parent=131 // pred_fallthru
          _
      $region132: #{tpu_custom_call.1} parent=5 // pred_fallthru
        _
    $region6: #{tpu_custom_call.1} parent=1 // loop_footer
      %s40 = sadd.s32 1, %s36
    $region7: #{tpu_custom_call.1} parent=1 // loop_footer_branch
      %35 = sbr.rel target = $region3
    $region8: #{tpu_custom_call.1} parent=1 // loop_exit
      _
    %2356 = vsyncpa [#allocation5], 1
    %s2357 = scalar_lea.sflag [#allocation5], 1
    %2358 = vsyncpa %s2357, 1
    %2359 = vsyncpa [#allocation8], 1
    %s2360 = scalar_lea.sflag [#allocation8], 1
    %2361 = vsyncpa %s2360, 1
    %2362 = vsyncpa [#allocation11], 1
    %2363 = vsyncpa [#allocation6], 1
    %s2364 = scalar_lea.sflag [#allocation6], 1
    %2365 = vsyncpa %s2364, 1

</llo_original>
